<compile_context>
chip_gen: v6e
topology: v6e:2x2x1
jax: 0.10.0
libtpu: 0.0.40
codegen_flags: <defaults>
</compile_context>

<pallas_src>
import jax
import jax.numpy as jnp
from jax.experimental import pallas as pl
from jax.experimental.pallas import tpu as pltpu


def _elu(v):
    # nn.ELU with alpha=1.0; exp(min(v,0)) keeps the dead branch finite.
    return jnp.where(v > 0, v, jnp.exp(jnp.minimum(v, 0.0)) - 1.0)


def _began_disc_kernel(x_ref,
                       me0_ref, be0_ref, me1_ref, be1_ref, me2_ref, be2_ref,
                       wf1_ref, bf1_ref, wf2_ref, bf2_ref,
                       md0_ref, bd0_ref, md1_ref, bd1_ref, md2_ref, bd2_ref,
                       o_ref):
    """All layers as (B, K) @ (K, N) dots on lane-dense 2-D slabs."""

    def lin(v, m_ref, b_ref):
        return (jnp.dot(v, m_ref[...], preferred_element_type=jnp.float32)
                + b_ref[...])

    x = x_ref[...].astype(jnp.float32)          # (B, n*H*W), NCHW flatten order

    # ----- encoder (blocks == 1): conv, conv+ELU, conv+ELU -----
    h = lin(x, me0_ref, be0_ref)                # first conv has no ELU
    h = _elu(lin(h, me1_ref, be1_ref))
    h = _elu(lin(h, me2_ref, be2_ref))

    # ----- fc1 / fc2 (no nonlinearity between them in the original forward) ---
    z = lin(h, wf1_ref, bf1_ref)                # (B, h_dim)
    y = lin(z, wf2_ref, bf2_ref)                # (B, n*H*W), already NCHW order

    # ----- decoder (blocks == 1): conv+ELU, conv+ELU, final conv -----
    d = _elu(lin(y, md0_ref, bd0_ref))
    d = _elu(lin(d, md1_ref, bd1_ref))
    o_ref[...] = lin(d, md2_ref, bd2_ref).astype(o_ref.dtype)   # (B, channel*H*W)


def make_params(key, n, h_dim, channel, H=8, W=8):
    """Deterministic parameters in the PyTorch layouts:
       conv: (Cout, Cin, 3, 3) + (Cout,);  linear: (out, in) + (out,)."""
    keys = jax.random.split(key, 8)

    def conv_p(k, cin, cout):
        kw, kb = jax.random.split(k)
        s = 1.0 / jnp.sqrt(cin * 9.0)
        w = jax.random.uniform(kw, (cout, cin, 3, 3), jnp.float32, -s, s)
        b = jax.random.uniform(kb, (cout,), jnp.float32, -s, s)
        return w, b

    def lin_p(k, fin, fout):
        kw, kb = jax.random.split(k)
        s = 1.0 / jnp.sqrt(float(fin))
        w = jax.random.uniform(kw, (fout, fin), jnp.float32, -s, s)
        b = jax.random.uniform(kb, (fout,), jnp.float32, -s, s)
        return w, b

    return {
        "e0": conv_p(keys[0], n, n),
        "e1": conv_p(keys[1], n, n),
        "e2": conv_p(keys[2], n, n),
        "fc1": lin_p(keys[3], H * W * n, h_dim),
        "fc2": lin_p(keys[4], h_dim, H * W * n),
        "d0": conv_p(keys[5], n, n),
        "d1": conv_p(keys[6], n, channel) if False else conv_p(keys[6], n, n),
        "d2": conv_p(keys[7], n, channel),
    }


def began_discriminator(x_nchw, params, n, h_dim):
    """Wrapper: NCHW in / NCHW out (matches the PyTorch module)."""
    B, C, H, W = x_nchw.shape
    channel = params["d2"][0].shape[0]

    def conv_as_dense(w, b):
        # Exact dense matrix of the 3x3 SAME conv in NCHW flatten order:
        # apply the conv to an identity basis (pure re-embedding of weights).
        cout, cin = w.shape[0], w.shape[1]
        eye = jnp.eye(cin * H * W, dtype=jnp.float32).reshape(cin * H * W, cin, H, W)
        cols = jax.lax.conv_general_dilated(
            eye, w, (1, 1), "SAME",
            dimension_numbers=("NCHW", "OIHW", "NCHW"))
        m = cols.reshape(cin * H * W, cout * H * W)
        b_flat = jnp.repeat(b, H * W).reshape(1, cout * H * W)
        return m, b_flat

    W1, b1 = params["fc1"]
    W2, b2 = params["fc2"]

    args = [x_nchw.reshape(B, C * H * W)]           # NCHW flatten, lane-dense
    for name in ("e0", "e1", "e2"):
        m, bf = conv_as_dense(*params[name])
        args += [m, bf]
    args += [W1.T, b1.reshape(1, -1), W2.T, b2.reshape(1, -1)]
    for name in ("d0", "d1", "d2"):
        m, bf = conv_as_dense(*params[name])
        args += [m, bf]

    f_in = n * H * W
    f_out = channel * H * W
    flops = 2 * B * (5 * f_in * f_in + f_in * h_dim + h_dim * f_in + f_in * f_out)
    bytes_accessed = sum(int(a.size) * 4 for a in args) + B * f_out * 4
    cost = pl.CostEstimate(flops=flops,
                           transcendentals=4 * B * f_in,
                           bytes_accessed=bytes_accessed)

    out_flat = pl.pallas_call(
        _began_disc_kernel,
        out_shape=jax.ShapeDtypeStruct((B, f_out), jnp.float32),
        in_specs=[pl.BlockSpec(memory_space=pltpu.MemorySpace.VMEM)
                  for _ in range(len(args))],
        out_specs=pl.BlockSpec(memory_space=pltpu.MemorySpace.VMEM),
        cost_estimate=cost,
    )(*args)
    return out_flat.reshape(B, channel, H, W)


def reference(x, params, n, h_dim):
    """Pure-JAX NCHW reference mirroring the PyTorch forward."""
    B, _, H, W = x.shape
    hp = jax.lax.Precision.HIGHEST

    def conv(v, w, b):
        y = jax.lax.conv_general_dilated(
            v, w, (1, 1), "SAME",
            dimension_numbers=("NCHW", "OIHW", "NCHW"), precision=hp)
        return y + b[None, :, None, None]

    v = conv(x, *params["e0"])
    v = _elu(conv(v, *params["e1"]))
    v = _elu(conv(v, *params["e2"]))
    flat = v.reshape(B, -1)
    W1, b1 = params["fc1"]
    W2, b2 = params["fc2"]
    z = jnp.dot(flat, W1.T, precision=hp) + b1
    y = jnp.dot(z, W2.T, precision=hp) + b2
    v = y.reshape(B, n, H, W)
    v = _elu(conv(v, *params["d0"]))
    v = _elu(conv(v, *params["d1"]))
    v = conv(v, *params["d2"])
    return v


if __name__ == "__main__":
    B, n, h_dim = 2, 4, 32
    channel, H, W = n, 8, 8          # input_dims = (n, 8, 8) -> blocks = 1

    key = jax.random.PRNGKey(0)
    kx, kp = jax.random.split(key)
    x = jax.random.normal(kx, (B, channel, H, W), jnp.float32)
    params = make_params(kp, n, h_dim, channel, H, W)

    out = jax.block_until_ready(began_discriminator(x, params, n, h_dim))
    ref = jax.block_until_ready(reference(x, params, n, h_dim))

    assert out.shape == (B, channel, H, W), out.shape
    assert jnp.allclose(out, ref, atol=2e-4, rtol=2e-3), \
        float(jnp.max(jnp.abs(out - ref)))
    print("KERNEL_OK")
</pallas_src>

<mosaic_0001>
module attributes {stable_mosaic.version = 11 : i64} {
  func.func @_began_disc_kernel(%arg0: memref<2x256xf32, #tpu.memory_space<vmem>>, %arg1: memref<256x256xf32, #tpu.memory_space<vmem>>, %arg2: memref<1x256xf32, #tpu.memory_space<vmem>>, %arg3: memref<256x256xf32, #tpu.memory_space<vmem>>, %arg4: memref<1x256xf32, #tpu.memory_space<vmem>>, %arg5: memref<256x256xf32, #tpu.memory_space<vmem>>, %arg6: memref<1x256xf32, #tpu.memory_space<vmem>>, %arg7: memref<256x32xf32, #tpu.memory_space<vmem>>, %arg8: memref<1x32xf32, #tpu.memory_space<vmem>>, %arg9: memref<32x256xf32, #tpu.memory_space<vmem>>, %arg10: memref<1x256xf32, #tpu.memory_space<vmem>>, %arg11: memref<256x256xf32, #tpu.memory_space<vmem>>, %arg12: memref<1x256xf32, #tpu.memory_space<vmem>>, %arg13: memref<256x256xf32, #tpu.memory_space<vmem>>, %arg14: memref<1x256xf32, #tpu.memory_space<vmem>>, %arg15: memref<256x256xf32, #tpu.memory_space<vmem>>, %arg16: memref<1x256xf32, #tpu.memory_space<vmem>>, %arg17: memref<2x256xf32, #tpu.memory_space<vmem>>) attributes {dimension_semantics = [], scalar_prefetch = 0 : i64, scratch_operands = 0 : i64, tpu.core_type = #tpu.core_type<tc>} {
    %c0 = arith.constant 0 : index
    %c0_0 = arith.constant 0 : index
    %0 = vector.load %arg0[%c0, %c0_0] : memref<2x256xf32, #tpu.memory_space<vmem>>, vector<2x256xf32>
    %c0_1 = arith.constant 0 : index
    %c0_2 = arith.constant 0 : index
    %1 = vector.load %arg1[%c0_1, %c0_2] : memref<256x256xf32, #tpu.memory_space<vmem>>, vector<256x256xf32>
    %cst = arith.constant dense<0.000000e+00> : vector<2x256xf32>
    %2 = tpu.matmul %0, %1, %cst {dimension_numbers = #tpu.dot_dimension_numbers<[1], [0], [0], [1], [0, 0, 1, 1], [], []>} : vector<2x256xf32>, vector<256x256xf32>, vector<2x256xf32> -> vector<2x256xf32>
    %c0_3 = arith.constant 0 : index
    %c0_4 = arith.constant 0 : index
    %3 = vector.load %arg2[%c0_3, %c0_4] : memref<1x256xf32, #tpu.memory_space<vmem>>, vector<1x256xf32>
    %4 = vector.broadcast %3 : vector<1x256xf32> to vector<2x256xf32>
    %5 = arith.addf %2, %4 : vector<2x256xf32>
    %c0_5 = arith.constant 0 : index
    %c0_6 = arith.constant 0 : index
    %6 = vector.load %arg3[%c0_5, %c0_6] : memref<256x256xf32, #tpu.memory_space<vmem>>, vector<256x256xf32>
    %cst_7 = arith.constant dense<0.000000e+00> : vector<2x256xf32>
    %7 = tpu.matmul %5, %6, %cst_7 {dimension_numbers = #tpu.dot_dimension_numbers<[1], [0], [0], [1], [0, 0, 1, 1], [], []>} : vector<2x256xf32>, vector<256x256xf32>, vector<2x256xf32> -> vector<2x256xf32>
    %c0_8 = arith.constant 0 : index
    %c0_9 = arith.constant 0 : index
    %8 = vector.load %arg4[%c0_8, %c0_9] : memref<1x256xf32, #tpu.memory_space<vmem>>, vector<1x256xf32>
    %9 = vector.broadcast %8 : vector<1x256xf32> to vector<2x256xf32>
    %10 = arith.addf %7, %9 : vector<2x256xf32>
    %cst_10 = arith.constant 0.000000e+00 : f32
    %11 = vector.broadcast %cst_10 : f32 to vector<2x256xf32>
    %12 = arith.cmpf ogt, %10, %11 : vector<2x256xf32>
    %cst_11 = arith.constant 0.000000e+00 : f32
    %13 = vector.broadcast %cst_11 : f32 to vector<2x256xf32>
    %14 = arith.minimumf %10, %13 : vector<2x256xf32>
    %15 = math.exp %14 : vector<2x256xf32>
    %cst_12 = arith.constant 1.000000e+00 : f32
    %16 = vector.broadcast %cst_12 : f32 to vector<2x256xf32>
    %17 = arith.subf %15, %16 : vector<2x256xf32>
    %18 = arith.select %12, %10, %17 : vector<2x256xi1>, vector<2x256xf32>
    %c0_13 = arith.constant 0 : index
    %c0_14 = arith.constant 0 : index
    %19 = vector.load %arg5[%c0_13, %c0_14] : memref<256x256xf32, #tpu.memory_space<vmem>>, vector<256x256xf32>
    %cst_15 = arith.constant dense<0.000000e+00> : vector<2x256xf32>
    %20 = tpu.matmul %18, %19, %cst_15 {dimension_numbers = #tpu.dot_dimension_numbers<[1], [0], [0], [1], [0, 0, 1, 1], [], []>} : vector<2x256xf32>, vector<256x256xf32>, vector<2x256xf32> -> vector<2x256xf32>
    %c0_16 = arith.constant 0 : index
    %c0_17 = arith.constant 0 : index
    %21 = vector.load %arg6[%c0_16, %c0_17] : memref<1x256xf32, #tpu.memory_space<vmem>>, vector<1x256xf32>
    %22 = vector.broadcast %21 : vector<1x256xf32> to vector<2x256xf32>
    %23 = arith.addf %20, %22 : vector<2x256xf32>
    %cst_18 = arith.constant 0.000000e+00 : f32
    %24 = vector.broadcast %cst_18 : f32 to vector<2x256xf32>
    %25 = arith.cmpf ogt, %23, %24 : vector<2x256xf32>
    %cst_19 = arith.constant 0.000000e+00 : f32
    %26 = vector.broadcast %cst_19 : f32 to vector<2x256xf32>
    %27 = arith.minimumf %23, %26 : vector<2x256xf32>
    %28 = math.exp %27 : vector<2x256xf32>
    %cst_20 = arith.constant 1.000000e+00 : f32
    %29 = vector.broadcast %cst_20 : f32 to vector<2x256xf32>
    %30 = arith.subf %28, %29 : vector<2x256xf32>
    %31 = arith.select %25, %23, %30 : vector<2x256xi1>, vector<2x256xf32>
    %c0_21 = arith.constant 0 : index
    %c0_22 = arith.constant 0 : index
    %32 = vector.load %arg7[%c0_21, %c0_22] : memref<256x32xf32, #tpu.memory_space<vmem>>, vector<256x32xf32>
    %cst_23 = arith.constant dense<0.000000e+00> : vector<2x32xf32>
    %33 = tpu.matmul %31, %32, %cst_23 {dimension_numbers = #tpu.dot_dimension_numbers<[1], [0], [0], [1], [0, 0, 1, 1], [], []>} : vector<2x256xf32>, vector<256x32xf32>, vector<2x32xf32> -> vector<2x32xf32>
    %c0_24 = arith.constant 0 : index
    %c0_25 = arith.constant 0 : index
    %34 = vector.load %arg8[%c0_24, %c0_25] : memref<1x32xf32, #tpu.memory_space<vmem>>, vector<1x32xf32>
    %35 = vector.broadcast %34 : vector<1x32xf32> to vector<2x32xf32>
    %36 = arith.addf %33, %35 : vector<2x32xf32>
    %c0_26 = arith.constant 0 : index
    %c0_27 = arith.constant 0 : index
    %37 = vector.load %arg9[%c0_26, %c0_27] : memref<32x256xf32, #tpu.memory_space<vmem>>, vector<32x256xf32>
    %cst_28 = arith.constant dense<0.000000e+00> : vector<2x256xf32>
    %38 = tpu.matmul %36, %37, %cst_28 {dimension_numbers = #tpu.dot_dimension_numbers<[1], [0], [0], [1], [0, 0, 1, 1], [], []>} : vector<2x32xf32>, vector<32x256xf32>, vector<2x256xf32> -> vector<2x256xf32>
    %c0_29 = arith.constant 0 : index
    %c0_30 = arith.constant 0 : index
    %39 = vector.load %arg10[%c0_29, %c0_30] : memref<1x256xf32, #tpu.memory_space<vmem>>, vector<1x256xf32>
    %40 = vector.broadcast %39 : vector<1x256xf32> to vector<2x256xf32>
    %41 = arith.addf %38, %40 : vector<2x256xf32>
    %c0_31 = arith.constant 0 : index
    %c0_32 = arith.constant 0 : index
    %42 = vector.load %arg11[%c0_31, %c0_32] : memref<256x256xf32, #tpu.memory_space<vmem>>, vector<256x256xf32>
    %cst_33 = arith.constant dense<0.000000e+00> : vector<2x256xf32>
    %43 = tpu.matmul %41, %42, %cst_33 {dimension_numbers = #tpu.dot_dimension_numbers<[1], [0], [0], [1], [0, 0, 1, 1], [], []>} : vector<2x256xf32>, vector<256x256xf32>, vector<2x256xf32> -> vector<2x256xf32>
    %c0_34 = arith.constant 0 : index
    %c0_35 = arith.constant 0 : index
    %44 = vector.load %arg12[%c0_34, %c0_35] : memref<1x256xf32, #tpu.memory_space<vmem>>, vector<1x256xf32>
    %45 = vector.broadcast %44 : vector<1x256xf32> to vector<2x256xf32>
    %46 = arith.addf %43, %45 : vector<2x256xf32>
    %cst_36 = arith.constant 0.000000e+00 : f32
    %47 = vector.broadcast %cst_36 : f32 to vector<2x256xf32>
    %48 = arith.cmpf ogt, %46, %47 : vector<2x256xf32>
    %cst_37 = arith.constant 0.000000e+00 : f32
    %49 = vector.broadcast %cst_37 : f32 to vector<2x256xf32>
    %50 = arith.minimumf %46, %49 : vector<2x256xf32>
    %51 = math.exp %50 : vector<2x256xf32>
    %cst_38 = arith.constant 1.000000e+00 : f32
    %52 = vector.broadcast %cst_38 : f32 to vector<2x256xf32>
    %53 = arith.subf %51, %52 : vector<2x256xf32>
    %54 = arith.select %48, %46, %53 : vector<2x256xi1>, vector<2x256xf32>
    %c0_39 = arith.constant 0 : index
    %c0_40 = arith.constant 0 : index
    %55 = vector.load %arg13[%c0_39, %c0_40] : memref<256x256xf32, #tpu.memory_space<vmem>>, vector<256x256xf32>
    %cst_41 = arith.constant dense<0.000000e+00> : vector<2x256xf32>
    %56 = tpu.matmul %54, %55, %cst_41 {dimension_numbers = #tpu.dot_dimension_numbers<[1], [0], [0], [1], [0, 0, 1, 1], [], []>} : vector<2x256xf32>, vector<256x256xf32>, vector<2x256xf32> -> vector<2x256xf32>
    %c0_42 = arith.constant 0 : index
    %c0_43 = arith.constant 0 : index
    %57 = vector.load %arg14[%c0_42, %c0_43] : memref<1x256xf32, #tpu.memory_space<vmem>>, vector<1x256xf32>
    %58 = vector.broadcast %57 : vector<1x256xf32> to vector<2x256xf32>
    %59 = arith.addf %56, %58 : vector<2x256xf32>
    %cst_44 = arith.constant 0.000000e+00 : f32
    %60 = vector.broadcast %cst_44 : f32 to vector<2x256xf32>
    %61 = arith.cmpf ogt, %59, %60 : vector<2x256xf32>
    %cst_45 = arith.constant 0.000000e+00 : f32
    %62 = vector.broadcast %cst_45 : f32 to vector<2x256xf32>
    %63 = arith.minimumf %59, %62 : vector<2x256xf32>
    %64 = math.exp %63 : vector<2x256xf32>
    %cst_46 = arith.constant 1.000000e+00 : f32
    %65 = vector.broadcast %cst_46 : f32 to vector<2x256xf32>
    %66 = arith.subf %64, %65 : vector<2x256xf32>
    %67 = arith.select %61, %59, %66 : vector<2x256xi1>, vector<2x256xf32>
    %c0_47 = arith.constant 0 : index
    %c0_48 = arith.constant 0 : index
    %68 = vector.load %arg15[%c0_47, %c0_48] : memref<256x256xf32, #tpu.memory_space<vmem>>, vector<256x256xf32>
    %cst_49 = arith.constant dense<0.000000e+00> : vector<2x256xf32>
    %69 = tpu.matmul %67, %68, %cst_49 {dimension_numbers = #tpu.dot_dimension_numbers<[1], [0], [0], [1], [0, 0, 1, 1], [], []>} : vector<2x256xf32>, vector<256x256xf32>, vector<2x256xf32> -> vector<2x256xf32>
    %c0_50 = arith.constant 0 : index
    %c0_51 = arith.constant 0 : index
    %70 = vector.load %arg16[%c0_50, %c0_51] : memref<1x256xf32, #tpu.memory_space<vmem>>, vector<1x256xf32>
    %71 = vector.broadcast %70 : vector<1x256xf32> to vector<2x256xf32>
    %72 = arith.addf %69, %71 : vector<2x256xf32>
    %c0_52 = arith.constant 0 : index
    %c0_53 = arith.constant 0 : index
    %73 = vector.load %arg17[%c0_52, %c0_53] : memref<2x256xf32, #tpu.memory_space<vmem>>, vector<2x256xf32>
    tpu.vector_store %arg17[%c0_52, %c0_53], %72 {strides = array<i32>} : memref<2x256xf32, #tpu.memory_space<vmem>>, vector<2x256xf32>,
    return
  }
}

</mosaic_0001>

<llo_original>
// kernel: tpu_custom_call.1
$region0: #{tpu_custom_call.1}
  #allocation0 [shape = 'u32[]', space=smem, size = 0x4, offset = 0x4, fixed_abs, tag = 'smem constant byte address 0x4 - core index']
  #allocation1 [shape = 'u32[144,128]{1,0:T(1,128)}', space=vmem, size = 0x12000, scoped, tag = 'internal scratch']
  %s0 = inlined_call_operand.vmem [shape: f32[2,256], index: 0, kind: input, shape index: {}]
  %s1 = inlined_call_operand.hbm [shape: f32[256,256], index: 1, kind: input, shape index: {}]
  %s2 = inlined_call_operand.vmem [shape: f32[1,256], index: 2, kind: input, shape index: {}]
  %s3 = inlined_call_operand.hbm [shape: f32[256,256], index: 3, kind: input, shape index: {}]
  %s4 = inlined_call_operand.vmem [shape: f32[1,256], index: 4, kind: input, shape index: {}]
  %s5 = inlined_call_operand.hbm [shape: f32[256,256], index: 5, kind: input, shape index: {}]
  %s6 = inlined_call_operand.vmem [shape: f32[1,256], index: 6, kind: input, shape index: {}]
  %s7 = inlined_call_operand.vmem [shape: f32[256,32], index: 7, kind: input, shape index: {}]
  %s8 = inlined_call_operand.vmem [shape: f32[1,32], index: 8, kind: input, shape index: {}]
  %s9 = inlined_call_operand.vmem [shape: f32[32,256], index: 9, kind: input, shape index: {}]
  %s10 = inlined_call_operand.vmem [shape: f32[1,256], index: 10, kind: input, shape index: {}]
  %s11 = inlined_call_operand.hbm [shape: f32[256,256], index: 11, kind: input, shape index: {}]
  %s12 = inlined_call_operand.vmem [shape: f32[1,256], index: 12, kind: input, shape index: {}]
  %s13 = inlined_call_operand.hbm [shape: f32[256,256], index: 13, kind: input, shape index: {}]
  %s14 = inlined_call_operand.vmem [shape: f32[1,256], index: 14, kind: input, shape index: {}]
  %s15 = inlined_call_operand.hbm [shape: f32[256,256], index: 15, kind: input, shape index: {}]
  %s16 = inlined_call_operand.vmem [shape: f32[1,256], index: 16, kind: input, shape index: {}]
  %s17 = inlined_call_operand.hbm [shape: f32[2,256], index: 17, kind: output, shape index: {}]
  %s18 = sld [smem:[#allocation0]]
  $region102: #{tpu_custom_call.1} parent=0
    _
  %s20 = ssub.s32 1, %s18
  %s21 = scalar_select 0, %s20, %s18
  $region1: #{tpu_custom_call.1} parent=0
    #allocation2 [shape = 'u8[262144]{0}', space=vmem, size = 0x40000, scoped, tag = 'input window, operand 1, single buffered']
    #allocation3 [shape = 's32[1]{0}', space=sflag, size = 0x4, scoped, tag = 'scoped memory for tpu_custom_call.1']
    #allocation4 [shape = 's32[1]{0}', space=sflag, size = 0x4, scoped, tag = 'scoped memory for tpu_custom_call.1']
    #allocation5 [shape = 'u8[262144]{0}', space=vmem, size = 0x40000, scoped, tag = 'input window, operand 3, single buffered']
    #allocation6 [shape = 's32[1]{0}', space=sflag, size = 0x4, scoped, tag = 'scoped memory for tpu_custom_call.1']
    #allocation7 [shape = 'u8[262144]{0}', space=vmem, size = 0x40000, scoped, tag = 'input window, operand 5, single buffered']
    #allocation8 [shape = 'u8[262144]{0}', space=vmem, size = 0x40000, scoped, tag = 'input window, operand 11, single buffered']
    #allocation9 [shape = 's32[1]{0}', space=sflag, size = 0x4, scoped, tag = 'scoped memory for tpu_custom_call.1']
    #allocation10 [shape = 'u8[262144]{0}', space=vmem, size = 0x40000, scoped, tag = 'input window, operand 13, single buffered']
    #allocation11 [shape = 'u8[262144]{0}', space=vmem, size = 0x40000, scoped, tag = 'input window, operand 15, single buffered']
    #allocation12 [shape = 's32[1]{0}', space=sflag, size = 0x4, scoped, tag = 'scoped memory for tpu_custom_call.1']
    #allocation13 [shape = 'u8[2048]{0}', space=vmem, size = 0x800, scoped, tag = 'output window, operand 0, single buffered']
    %22 = vsyncpa [#allocation3], 0
    %23 = vsyncpa [#allocation6], 0
    %24 = vsyncpa [#allocation9], 0
    %25 = vsyncpa [#allocation12], 0
    %26 = vsyncpa [#allocation4], 0
    // Predicated region
    $region2: #{tpu_custom_call.1} parent=1 // pred_check
      _
    $region3: #{tpu_custom_call.1} parent=1 // pred_check_branch
      %28 = sbr.rel (0) target = $region5
    $region4: #{tpu_custom_call.1} parent=1 // pred_region
      _
    $region5: #{tpu_custom_call.1} parent=1 // pred_fallthru
      _
    // Predicated region
    $region6: #{tpu_custom_call.1} parent=1 // pred_check
      _
    $region7: #{tpu_custom_call.1} parent=1 // pred_check_branch
      %30 = sbr.rel (0) target = $region9
    $region8: #{tpu_custom_call.1} parent=1 // pred_region
      %s32 = ssub.s32 8192, 8192
      %33 = vsyncadd [#allocation3], %s32
      %s34 = sshll.u32 [#allocation2], 4
      %s35 = int_to_ptr.vmem [resolvable:$true] %s34
      %40 = dma.hbm_to_vmem [thread:$0]  %s1, 8192, %s35, [#allocation3], 256, 256, 16
    $region9: #{tpu_custom_call.1} parent=1 // pred_fallthru
      _
    // Predicated region
    $region10: #{tpu_custom_call.1} parent=1 // pred_check
      _
    $region11: #{tpu_custom_call.1} parent=1 // pred_check_branch
      %42 = sbr.rel (0) target = $region13
    $region12: #{tpu_custom_call.1} parent=1 // pred_region
      _
    $region13: #{tpu_custom_call.1} parent=1 // pred_fallthru
      _
    // Predicated region
    $region14: #{tpu_custom_call.1} parent=1 // pred_check
      _
    $region15: #{tpu_custom_call.1} parent=1 // pred_check_branch
      %44 = sbr.rel (0) target = $region17
    $region16: #{tpu_custom_call.1} parent=1 // pred_region
      %s46 = ssub.s32 8192, 8192
      %47 = vsyncadd [#allocation6], %s46
      %s48 = sshll.u32 [#allocation5], 4
      %s49 = int_to_ptr.vmem [resolvable:$true] %s48
      %54 = dma.hbm_to_vmem [thread:$0]  %s3, 8192, %s49, [#allocation6], 256, 256, 16
    $region17: #{tpu_custom_call.1} parent=1 // pred_fallthru
      _
    // Predicated region
    $region18: #{tpu_custom_call.1} parent=1 // pred_check
      _
    $region19: #{tpu_custom_call.1} parent=1 // pred_check_branch
      %56 = sbr.rel (0) target = $region21
    $region20: #{tpu_custom_call.1} parent=1 // pred_region
      _
    $region21: #{tpu_custom_call.1} parent=1 // pred_fallthru
      _
    // Predicated region
    $region22: #{tpu_custom_call.1} parent=1 // pred_check
      _
    $region23: #{tpu_custom_call.1} parent=1 // pred_check_branch
      %58 = sbr.rel (0) target = $region25
    $region24: #{tpu_custom_call.1} parent=1 // pred_region
      %s60 = ssub.s32 8192, 8192
      %61 = vsyncadd [#allocation6], %s60
      %s62 = sshll.u32 [#allocation7], 4
      %s63 = int_to_ptr.vmem [resolvable:$true] %s62
      %68 = dma.hbm_to_vmem [thread:$0]  %s5, 8192, %s63, [#allocation6], 256, 256, 16
    $region25: #{tpu_custom_call.1} parent=1 // pred_fallthru
      _
    // Predicated region
    $region26: #{tpu_custom_call.1} parent=1 // pred_check
      _
    $region27: #{tpu_custom_call.1} parent=1 // pred_check_branch
      %70 = sbr.rel (0) target = $region29
    $region28: #{tpu_custom_call.1} parent=1 // pred_region
      _
    $region29: #{tpu_custom_call.1} parent=1 // pred_fallthru
      _
    // Predicated region
    $region30: #{tpu_custom_call.1} parent=1 // pred_check
      _
    $region31: #{tpu_custom_call.1} parent=1 // pred_check_branch
      %72 = sbr.rel (0) target = $region33
    $region32: #{tpu_custom_call.1} parent=1 // pred_region
      _
    $region33: #{tpu_custom_call.1} parent=1 // pred_fallthru
      _
    // Predicated region
    $region34: #{tpu_custom_call.1} parent=1 // pred_check
      _
    $region35: #{tpu_custom_call.1} parent=1 // pred_check_branch
      %74 = sbr.rel (0) target = $region37
    $region36: #{tpu_custom_call.1} parent=1 // pred_region
      _
    $region37: #{tpu_custom_call.1} parent=1 // pred_fallthru
      _
    // Predicated region
    $region38: #{tpu_custom_call.1} parent=1 // pred_check
      _
    $region39: #{tpu_custom_call.1} parent=1 // pred_check_branch
      %76 = sbr.rel (0) target = $region41
    $region40: #{tpu_custom_call.1} parent=1 // pred_region
      _
    $region41: #{tpu_custom_call.1} parent=1 // pred_fallthru
      _
    // Predicated region
    $region42: #{tpu_custom_call.1} parent=1 // pred_check
      _
    $region43: #{tpu_custom_call.1} parent=1 // pred_check_branch
      %78 = sbr.rel (0) target = $region45
    $region44: #{tpu_custom_call.1} parent=1 // pred_region
      _
    $region45: #{tpu_custom_call.1} parent=1 // pred_fallthru
      _
    // Predicated region
    $region46: #{tpu_custom_call.1} parent=1 // pred_check
      _
    $region47: #{tpu_custom_call.1} parent=1 // pred_check_branch
      %80 = sbr.rel (0) target = $region49
    $region48: #{tpu_custom_call.1} parent=1 // pred_region
      %s82 = ssub.s32 8192, 8192
      %83 = vsyncadd [#allocation9], %s82
      %s84 = sshll.u32 [#allocation8], 4
      %s85 = int_to_ptr.vmem [resolvable:$true] %s84
      %90 = dma.hbm_to_vmem [thread:$0]  %s11, 8192, %s85, [#allocation9], 256, 256, 16
    $region49: #{tpu_custom_call.1} parent=1 // pred_fallthru
      _
    // Predicated region
    $region50: #{tpu_custom_call.1} parent=1 // pred_check
      _
    $region51: #{tpu_custom_call.1} parent=1 // pred_check_branch
      %92 = sbr.rel (0) target = $region53
    $region52: #{tpu_custom_call.1} parent=1 // pred_region
      _
    $region53: #{tpu_custom_call.1} parent=1 // pred_fallthru
      _
    // Predicated region
    $region54: #{tpu_custom_call.1} parent=1 // pred_check
      _
    $region55: #{tpu_custom_call.1} parent=1 // pred_check_branch
      %94 = sbr.rel (0) target = $region57
    $region56: #{tpu_custom_call.1} parent=1 // pred_region
      %s96 = ssub.s32 8192, 8192
      %97 = vsyncadd [#allocation9], %s96
      %s98 = sshll.u32 [#allocation10], 4
      %s99 = int_to_ptr.vmem [resolvable:$true] %s98
      %104 = dma.hbm_to_vmem [thread:$0]  %s13, 8192, %s99, [#allocation9], 256, 256, 16
    $region57: #{tpu_custom_call.1} parent=1 // pred_fallthru
      _
    // Predicated region
    $region58: #{tpu_custom_call.1} parent=1 // pred_check
      _
    $region59: #{tpu_custom_call.1} parent=1 // pred_check_branch
      %106 = sbr.rel (0) target = $region61
    $region60: #{tpu_custom_call.1} parent=1 // pred_region
      _
    $region61: #{tpu_custom_call.1} parent=1 // pred_fallthru
      _
    // Predicated region
    $region62: #{tpu_custom_call.1} parent=1 // pred_check
      _
    $region63: #{tpu_custom_call.1} parent=1 // pred_check_branch
      %108 = sbr.rel (0) target = $region65
    $region64: #{tpu_custom_call.1} parent=1 // pred_region
      %s110 = ssub.s32 8192, 8192
      %111 = vsyncadd [#allocation12], %s110
      %s112 = sshll.u32 [#allocation11], 4
      %s113 = int_to_ptr.vmem [resolvable:$true] %s112
      %118 = dma.hbm_to_vmem [thread:$0]  %s15, 8192, %s113, [#allocation12], 256, 256, 16
    $region65: #{tpu_custom_call.1} parent=1 // pred_fallthru
      _
    // Predicated region
    $region66: #{tpu_custom_call.1} parent=1 // pred_check
      _
    $region67: #{tpu_custom_call.1} parent=1 // pred_check_branch
      %120 = sbr.rel (0) target = $region69
    $region68: #{tpu_custom_call.1} parent=1 // pred_region
      _
    $region69: #{tpu_custom_call.1} parent=1 // pred_fallthru
      _
    // Predicated region
    $region70: #{tpu_custom_call.1} parent=1 // pred_check
      _
    $region71: #{tpu_custom_call.1} parent=1 // pred_check_branch
      %122 = sbr.rel (0) target = $region73
    $region72: #{tpu_custom_call.1} parent=1 // pred_region
      %123 = dma.done [#allocation3], 8192
    $region73: #{tpu_custom_call.1} parent=1 // pred_fallthru
      _
    // Predicated region
    $region74: #{tpu_custom_call.1} parent=1 // pred_check
      _
    $region75: #{tpu_custom_call.1} parent=1 // pred_check_branch
      %125 = sbr.rel (0) target = $region77
    $region76: #{tpu_custom_call.1} parent=1 // pred_region
      %126 = dma.done [#allocation6], 8192
    $region77: #{tpu_custom_call.1} parent=1 // pred_fallthru
      _
    // Predicated region
    $region78: #{tpu_custom_call.1} parent=1 // pred_check
      _
    $region79: #{tpu_custom_call.1} parent=1 // pred_check_branch
      %128 = sbr.rel (0) target = $region81
    $region80: #{tpu_custom_call.1} parent=1 // pred_region
      %129 = dma.done [#allocation6], 8192
    $region81: #{tpu_custom_call.1} parent=1 // pred_fallthru
      _
    // Predicated region
    $region82: #{tpu_custom_call.1} parent=1 // pred_check
      _
    $region83: #{tpu_custom_call.1} parent=1 // pred_check_branch
      %131 = sbr.rel (0) target = $region85
    $region84: #{tpu_custom_call.1} parent=1 // pred_region
      %132 = dma.done [#allocation9], 8192
    $region85: #{tpu_custom_call.1} parent=1 // pred_fallthru
      _
    // Predicated region
    $region86: #{tpu_custom_call.1} parent=1 // pred_check
      _
    $region87: #{tpu_custom_call.1} parent=1 // pred_check_branch
      %134 = sbr.rel (0) target = $region89
    $region88: #{tpu_custom_call.1} parent=1 // pred_region
      %135 = dma.done [#allocation9], 8192
    $region89: #{tpu_custom_call.1} parent=1 // pred_fallthru
      _
    // Predicated region
    $region90: #{tpu_custom_call.1} parent=1 // pred_check
      _
    $region91: #{tpu_custom_call.1} parent=1 // pred_check_branch
      %137 = sbr.rel (0) target = $region93
    $region92: #{tpu_custom_call.1} parent=1 // pred_region
      %138 = dma.done [#allocation12], 8192
    $region93: #{tpu_custom_call.1} parent=1 // pred_fallthru
      _
    %v139 = vld [vmem:[%s0] sm:$0xf]
    %v140 = vld [vmem:[#allocation2] sm:$0xff]
    %v141 = vld [vmem:[#allocation2 + $0x8] sm:$0xff]
    %v142 = vld [vmem:[#allocation2 + $0x10] sm:$0xff]
    %v143 = vld [vmem:[#allocation2 + $0x18] sm:$0xff]
    %v144 = vld [vmem:[#allocation2 + $0x20] sm:$0xff]
    %v145 = vld [vmem:[#allocation2 + $0x28] sm:$0xff]
    %v146 = vld [vmem:[#allocation2 + $0x30] sm:$0xff]
    %v147 = vld [vmem:[#allocation2 + $0x38] sm:$0xff]
    %v148 = vld [vmem:[#allocation2 + $0x40] sm:$0xff]
    %v149 = vld [vmem:[#allocation2 + $0x48] sm:$0xff]
    %v150 = vld [vmem:[#allocation2 + $0x50] sm:$0xff]
    %v151 = vld [vmem:[#allocation2 + $0x58] sm:$0xff]
    %v152 = vld [vmem:[#allocation2 + $0x60] sm:$0xff]
    %v153 = vld [vmem:[#allocation2 + $0x68] sm:$0xff]
    %v154 = vld [vmem:[#allocation2 + $0x70] sm:$0xff]
    %v155 = vld [vmem:[#allocation2 + $0x78] sm:$0xff]
    %v156 = vld [vmem:[#allocation2 + $0x80] sm:$0xff]
    %v157 = vld [vmem:[#allocation2 + $0x88] sm:$0xff]
    %v158 = vld [vmem:[#allocation2 + $0x90] sm:$0xff]
    %v159 = vld [vmem:[#allocation2 + $0x98] sm:$0xff]
    %v160 = vld [vmem:[#allocation2 + $0xa0] sm:$0xff]
    %v161 = vld [vmem:[#allocation2 + $0xa8] sm:$0xff]
    %v162 = vld [vmem:[#allocation2 + $0xb0] sm:$0xff]
    %v163 = vld [vmem:[#allocation2 + $0xb8] sm:$0xff]
    %v164 = vld [vmem:[#allocation2 + $0xc0] sm:$0xff]
    %v165 = vld [vmem:[#allocation2 + $0xc8] sm:$0xff]
    %v166 = vld [vmem:[#allocation2 + $0xd0] sm:$0xff]
    %v167 = vld [vmem:[#allocation2 + $0xd8] sm:$0xff]
    %v168 = vld [vmem:[#allocation2 + $0xe0] sm:$0xff]
    %v169 = vld [vmem:[#allocation2 + $0xe8] sm:$0xff]
    %v170 = vld [vmem:[#allocation2 + $0xf0] sm:$0xff]
    %v171 = vld [vmem:[#allocation2 + $0xf8] sm:$0xff]
    %v172 = vld [vmem:[#allocation2 + $0x100] sm:$0xff]
    %v173 = vld [vmem:[#allocation2 + $0x108] sm:$0xff]
    %v174 = vld [vmem:[#allocation2 + $0x110] sm:$0xff]
    %v175 = vld [vmem:[#allocation2 + $0x118] sm:$0xff]
    %v176 = vld [vmem:[#allocation2 + $0x120] sm:$0xff]
    %v177 = vld [vmem:[#allocation2 + $0x128] sm:$0xff]
    %v178 = vld [vmem:[#allocation2 + $0x130] sm:$0xff]
    %v179 = vld [vmem:[#allocation2 + $0x138] sm:$0xff]
    %v180 = vld [vmem:[#allocation2 + $0x140] sm:$0xff]
    %v181 = vld [vmem:[#allocation2 + $0x148] sm:$0xff]
    %v182 = vld [vmem:[#allocation2 + $0x150] sm:$0xff]
    %v183 = vld [vmem:[#allocation2 + $0x158] sm:$0xff]
    %v184 = vld [vmem:[#allocation2 + $0x160] sm:$0xff]
    %v185 = vld [vmem:[#allocation2 + $0x168] sm:$0xff]
    %v186 = vld [vmem:[#allocation2 + $0x170] sm:$0xff]
    %v187 = vld [vmem:[#allocation2 + $0x178] sm:$0xff]
    %v188 = vld [vmem:[#allocation2 + $0x180] sm:$0xff]
    %v189 = vld [vmem:[#allocation2 + $0x188] sm:$0xff]
    %v190 = vld [vmem:[#allocation2 + $0x190] sm:$0xff]
    %v191 = vld [vmem:[#allocation2 + $0x198] sm:$0xff]
    %v192 = vld [vmem:[#allocation2 + $0x1a0] sm:$0xff]
    %v193 = vld [vmem:[#allocation2 + $0x1a8] sm:$0xff]
    %v194 = vld [vmem:[#allocation2 + $0x1b0] sm:$0xff]
    %v195 = vld [vmem:[#allocation2 + $0x1b8] sm:$0xff]
    %v196 = vld [vmem:[#allocation2 + $0x1c0] sm:$0xff]
    %v197 = vld [vmem:[#allocation2 + $0x1c8] sm:$0xff]
    %v198 = vld [vmem:[#allocation2 + $0x1d0] sm:$0xff]
    %v199 = vld [vmem:[#allocation2 + $0x1d8] sm:$0xff]
    %v200 = vld [vmem:[#allocation2 + $0x1e0] sm:$0xff]
    %v201 = vld [vmem:[#allocation2 + $0x1e8] sm:$0xff]
    %v202 = vld [vmem:[#allocation2 + $0x1f0] sm:$0xff]
    %v203 = vld [vmem:[#allocation2 + $0x1f8] sm:$0xff]
    %v204 = vld [vmem:[%s2] sm:$0x3]
    %v206 = vlaneseq
    %v207 = vshrl.u32 %v206, 7
    %v208 = vsub.s32 0, %v207
    %v209 = vrot.slane %v204, %v208
    %v210 = vlaneseq
    %v211 = vshrl.u32 %v210, 7
    %v212 = vsub.s32 1, %v211
    %v213 = vrot.slane %v204, %v212
    %v218 = vunpack.c.l.s4 1983009808
    %v219 = vunpack.c.0.s8 %v218
    %v220 = vlaneseq
    %v221 = vshrl.u32 %v220, 7
    %v222 = vsub.s32 %v219, %v221
    %v223 = vrot.slane %v139, %v222
    %v224 = vcombine.high %v223, %v223
    %227 = vmatprep.subr.mxu0 %v171
    %228 = vmatpush1.msra.mxu0 %v170
    %229 = vmatprep.subr.mxu0 %v169
    %230 = vmatpush1.msra.mxu0 %v168
    %231 = vmatprep.subr.mxu0 %v167
    %232 = vmatpush1.msra.mxu0 %v166
    %233 = vmatprep.subr.mxu0 %v165
    %234 = vmatpush1.msra.mxu0 %v164
    %235 = vmatprep.subr.mxu0 %v163
    %236 = vmatpush1.msra.mxu0 %v162
    %237 = vmatprep.subr.mxu0 %v161
    %238 = vmatpush1.msra.mxu0 %v160
    %239 = vmatprep.subr.mxu0 %v159
    %240 = vmatpush1.msra.mxu0 %v158
    %241 = vmatprep.subr.mxu0 %v157
    %242 = vmatpush1.msra.mxu0 %v156
    %243 = vmatprep.subr.mxu0 %v155
    %244 = vmatpush1.msra.mxu0 %v154
    %245 = vmatprep.subr.mxu0 %v153
    %246 = vmatpush1.msra.mxu0 %v152
    %247 = vmatprep.subr.mxu0 %v151
    %248 = vmatpush1.msra.mxu0 %v150
    %249 = vmatprep.subr.mxu0 %v149
    %250 = vmatpush1.msra.mxu0 %v148
    %251 = vmatprep.subr.mxu0 %v147
    %252 = vmatpush1.msra.mxu0 %v146
    %253 = vmatprep.subr.mxu0 %v145
    %254 = vmatpush1.msra.mxu0 %v144
    %255 = vmatprep.subr.mxu0 %v143
    %256 = vmatpush1.msra.mxu0 %v142
    %257 = vmatprep.subr.mxu0 %v141
    %258 = vmatpush1.msra.mxu0 %v140
    %259 = vmatprep.subr.mxu0 %v203
    %260 = vmatpush2.msra.mxu0 %v202
    %261 = vmatprep.subr.mxu0 %v201
    %262 = vmatpush2.msra.mxu0 %v200
    %263 = vmatprep.subr.mxu0 %v199
    %264 = vmatpush2.msra.mxu0 %v198
    %265 = vmatprep.subr.mxu0 %v197
    %266 = vmatpush2.msra.mxu0 %v196
    %267 = vmatprep.subr.mxu0 %v195
    %268 = vmatpush2.msra.mxu0 %v194
    %269 = vmatprep.subr.mxu0 %v193
    %270 = vmatpush2.msra.mxu0 %v192
    %271 = vmatprep.subr.mxu0 %v191
    %272 = vmatpush2.msra.mxu0 %v190
    %273 = vmatprep.subr.mxu0 %v189
    %274 = vmatpush2.msra.mxu0 %v188
    %275 = vmatprep.subr.mxu0 %v187
    %276 = vmatpush2.msra.mxu0 %v186
    %277 = vmatprep.subr.mxu0 %v185
    %278 = vmatpush2.msra.mxu0 %v184
    %279 = vmatprep.subr.mxu0 %v183
    %280 = vmatpush2.msra.mxu0 %v182
    %281 = vmatprep.subr.mxu0 %v181
    %282 = vmatpush2.msra.mxu0 %v180
    %283 = vmatprep.subr.mxu0 %v179
    %284 = vmatpush2.msra.mxu0 %v178
    %285 = vmatprep.subr.mxu0 %v177
    %286 = vmatpush2.msra.mxu0 %v176
    %287 = vmatprep.subr.mxu0 %v175
    %288 = vmatpush2.msra.mxu0 %v174
    %289 = vmatprep.subr.mxu0 %v173
    %290 = vmatpush2.msra.mxu0 %v172
    %291 = vmatprep.mubr.f32.mxu0 %v224
    %292 = vmatmul.mubr.f32.gmra.mxu0 %v223
    %v293 = vpop.f32.mrf.mxu0
    %v294 = vadd.f32 %v209, %v293
    %v295 = vpop.f32.mrf.mxu0
    %v296 = vadd.f32 %v213, %v295
    %297 = vdwg.mxu0
    %v298 = vld [vmem:[#allocation5] sm:$0xff]
    %v299 = vld [vmem:[#allocation5 + $0x8] sm:$0xff]
    %v300 = vld [vmem:[#allocation5 + $0x10] sm:$0xff]
    %v301 = vld [vmem:[#allocation5 + $0x18] sm:$0xff]
    %v302 = vld [vmem:[#allocation5 + $0x20] sm:$0xff]
    %v303 = vld [vmem:[#allocation5 + $0x28] sm:$0xff]
    %v304 = vld [vmem:[#allocation5 + $0x30] sm:$0xff]
    %v305 = vld [vmem:[#allocation5 + $0x38] sm:$0xff]
    %v306 = vld [vmem:[#allocation5 + $0x40] sm:$0xff]
    %v307 = vld [vmem:[#allocation5 + $0x48] sm:$0xff]
    %v308 = vld [vmem:[#allocation5 + $0x50] sm:$0xff]
    %v309 = vld [vmem:[#allocation5 + $0x58] sm:$0xff]
    %v310 = vld [vmem:[#allocation5 + $0x60] sm:$0xff]
    %v311 = vld [vmem:[#allocation5 + $0x68] sm:$0xff]
    %v312 = vld [vmem:[#allocation5 + $0x70] sm:$0xff]
    %v313 = vld [vmem:[#allocation5 + $0x78] sm:$0xff]
    %v314 = vld [vmem:[#allocation5 + $0x80] sm:$0xff]
    %v315 = vld [vmem:[#allocation5 + $0x88] sm:$0xff]
    %v316 = vld [vmem:[#allocation5 + $0x90] sm:$0xff]
    %v317 = vld [vmem:[#allocation5 + $0x98] sm:$0xff]
    %v318 = vld [vmem:[#allocation5 + $0xa0] sm:$0xff]
    %v319 = vld [vmem:[#allocation5 + $0xa8] sm:$0xff]
    %v320 = vld [vmem:[#allocation5 + $0xb0] sm:$0xff]
    %v321 = vld [vmem:[#allocation5 + $0xb8] sm:$0xff]
    %v322 = vld [vmem:[#allocation5 + $0xc0] sm:$0xff]
    %v323 = vld [vmem:[#allocation5 + $0xc8] sm:$0xff]
    %v324 = vld [vmem:[#allocation5 + $0xd0] sm:$0xff]
    %v325 = vld [vmem:[#allocation5 + $0xd8] sm:$0xff]
    %v326 = vld [vmem:[#allocation5 + $0xe0] sm:$0xff]
    %v327 = vld [vmem:[#allocation5 + $0xe8] sm:$0xff]
    %v328 = vld [vmem:[#allocation5 + $0xf0] sm:$0xff]
    %v329 = vld [vmem:[#allocation5 + $0xf8] sm:$0xff]
    %v330 = vld [vmem:[#allocation5 + $0x100] sm:$0xff]
    %v331 = vld [vmem:[#allocation5 + $0x108] sm:$0xff]
    %v332 = vld [vmem:[#allocation5 + $0x110] sm:$0xff]
    %v333 = vld [vmem:[#allocation5 + $0x118] sm:$0xff]
    %v334 = vld [vmem:[#allocation5 + $0x120] sm:$0xff]
    %v335 = vld [vmem:[#allocation5 + $0x128] sm:$0xff]
    %v336 = vld [vmem:[#allocation5 + $0x130] sm:$0xff]
    %v337 = vld [vmem:[#allocation5 + $0x138] sm:$0xff]
    %v338 = vld [vmem:[#allocation5 + $0x140] sm:$0xff]
    %v339 = vld [vmem:[#allocation5 + $0x148] sm:$0xff]
    %v340 = vld [vmem:[#allocation5 + $0x150] sm:$0xff]
    %v341 = vld [vmem:[#allocation5 + $0x158] sm:$0xff]
    %v342 = vld [vmem:[#allocation5 + $0x160] sm:$0xff]
    %v343 = vld [vmem:[#allocation5 + $0x168] sm:$0xff]
    %v344 = vld [vmem:[#allocation5 + $0x170] sm:$0xff]
    %v345 = vld [vmem:[#allocation5 + $0x178] sm:$0xff]
    %v346 = vld [vmem:[#allocation5 + $0x180] sm:$0xff]
    %v347 = vld [vmem:[#allocation5 + $0x188] sm:$0xff]
    %v348 = vld [vmem:[#allocation5 + $0x190] sm:$0xff]
    %v349 = vld [vmem:[#allocation5 + $0x198] sm:$0xff]
    %v350 = vld [vmem:[#allocation5 + $0x1a0] sm:$0xff]
    %v351 = vld [vmem:[#allocation5 + $0x1a8] sm:$0xff]
    %v352 = vld [vmem:[#allocation5 + $0x1b0] sm:$0xff]
    %v353 = vld [vmem:[#allocation5 + $0x1b8] sm:$0xff]
    %v354 = vld [vmem:[#allocation5 + $0x1c0] sm:$0xff]
    %v355 = vld [vmem:[#allocation5 + $0x1c8] sm:$0xff]
    %v356 = vld [vmem:[#allocation5 + $0x1d0] sm:$0xff]
    %v357 = vld [vmem:[#allocation5 + $0x1d8] sm:$0xff]
    %v358 = vld [vmem:[#allocation5 + $0x1e0] sm:$0xff]
    %v359 = vld [vmem:[#allocation5 + $0x1e8] sm:$0xff]
    %v360 = vld [vmem:[#allocation5 + $0x1f0] sm:$0xff]
    %v361 = vld [vmem:[#allocation5 + $0x1f8] sm:$0xff]
    %v362 = vld [vmem:[%s4] sm:$0x3]
    %v364 = vlaneseq
    %v365 = vshrl.u32 %v364, 7
    %v366 = vsub.s32 0, %v365
    %v367 = vrot.slane %v362, %v366
    %v368 = vlaneseq
    %v369 = vshrl.u32 %v368, 7
    %v370 = vsub.s32 1, %v369
    %v371 = vrot.slane %v362, %v370
    %374 = vmatprep.subr.mxu0 %v329
    %375 = vmatpush1.msra.mxu0 %v328
    %376 = vmatprep.subr.mxu0 %v327
    %377 = vmatpush1.msra.mxu0 %v326
    %378 = vmatprep.subr.mxu0 %v325
    %379 = vmatpush1.msra.mxu0 %v324
    %380 = vmatprep.subr.mxu0 %v323
    %381 = vmatpush1.msra.mxu0 %v322
    %382 = vmatprep.subr.mxu0 %v321
    %383 = vmatpush1.msra.mxu0 %v320
    %384 = vmatprep.subr.mxu0 %v319
    %385 = vmatpush1.msra.mxu0 %v318
    %386 = vmatprep.subr.mxu0 %v317
    %387 = vmatpush1.msra.mxu0 %v316
    %388 = vmatprep.subr.mxu0 %v315
    %389 = vmatpush1.msra.mxu0 %v314
    %390 = vmatprep.subr.mxu0 %v313
    %391 = vmatpush1.msra.mxu0 %v312
    %392 = vmatprep.subr.mxu0 %v311
    %393 = vmatpush1.msra.mxu0 %v310
    %394 = vmatprep.subr.mxu0 %v309
    %395 = vmatpush1.msra.mxu0 %v308
    %396 = vmatprep.subr.mxu0 %v307
    %397 = vmatpush1.msra.mxu0 %v306
    %398 = vmatprep.subr.mxu0 %v305
    %399 = vmatpush1.msra.mxu0 %v304
    %400 = vmatprep.subr.mxu0 %v303
    %401 = vmatpush1.msra.mxu0 %v302
    %402 = vmatprep.subr.mxu0 %v301
    %403 = vmatpush1.msra.mxu0 %v300
    %404 = vmatprep.subr.mxu0 %v299
    %405 = vmatpush1.msra.mxu0 %v298
    %406 = vmatprep.subr.mxu0 %v361
    %407 = vmatpush2.msra.mxu0 %v360
    %408 = vmatprep.subr.mxu0 %v359
    %409 = vmatpush2.msra.mxu0 %v358
    %410 = vmatprep.subr.mxu0 %v357
    %411 = vmatpush2.msra.mxu0 %v356
    %412 = vmatprep.subr.mxu0 %v355
    %413 = vmatpush2.msra.mxu0 %v354
    %414 = vmatprep.subr.mxu0 %v353
    %415 = vmatpush2.msra.mxu0 %v352
    %416 = vmatprep.subr.mxu0 %v351
    %417 = vmatpush2.msra.mxu0 %v350
    %418 = vmatprep.subr.mxu0 %v349
    %419 = vmatpush2.msra.mxu0 %v348
    %420 = vmatprep.subr.mxu0 %v347
    %421 = vmatpush2.msra.mxu0 %v346
    %422 = vmatprep.subr.mxu0 %v345
    %423 = vmatpush2.msra.mxu0 %v344
    %424 = vmatprep.subr.mxu0 %v343
    %425 = vmatpush2.msra.mxu0 %v342
    %426 = vmatprep.subr.mxu0 %v341
    %427 = vmatpush2.msra.mxu0 %v340
    %428 = vmatprep.subr.mxu0 %v339
    %429 = vmatpush2.msra.mxu0 %v338
    %430 = vmatprep.subr.mxu0 %v337
    %431 = vmatpush2.msra.mxu0 %v336
    %432 = vmatprep.subr.mxu0 %v335
    %433 = vmatpush2.msra.mxu0 %v334
    %434 = vmatprep.subr.mxu0 %v333
    %435 = vmatpush2.msra.mxu0 %v332
    %436 = vmatprep.subr.mxu0 %v331
    %437 = vmatpush2.msra.mxu0 %v330
    %438 = vmatprep.mubr.f32.mxu0 %v296
    %439 = vmatmul.mubr.f32.gmra.mxu0 %v294
    %v440 = vpop.f32.mrf.mxu0
    %v441 = vadd.f32 %v367, %v440
    %v442 = vpop.f32.mrf.mxu0
    %v443 = vadd.f32 %v371, %v442
    %444 = vdwg.mxu0
    %vm445 = vcmp.gt.f32.partialorder %v441, 0.0
    %vm446 = vcmp.gt.f32.partialorder %v443, 0.0
    %v447 = vmin.f32 %v441, 0.0
    %v448 = vmin.f32 %v443, 0.0
    %v449 = vmul.f32 %v447, 1.442695
    %v450 = vpow.pop %v449
    %v451 = vmul.f32 %v448, 1.442695
    %v452 = vpow.pop %v451
    %v453 = vsub.f32 %v450, 1.0
    %v454 = vsub.f32 %v452, 1.0
    %v455 = vsel %vm445, %v441, %v453
    %v456 = vsel %vm446, %v443, %v454
    %v457 = vld [vmem:[#allocation7] sm:$0xff]
    %v458 = vld [vmem:[#allocation7 + $0x8] sm:$0xff]
    %v459 = vld [vmem:[#allocation7 + $0x10] sm:$0xff]
    %v460 = vld [vmem:[#allocation7 + $0x18] sm:$0xff]
    %v461 = vld [vmem:[#allocation7 + $0x20] sm:$0xff]
    %v462 = vld [vmem:[#allocation7 + $0x28] sm:$0xff]
    %v463 = vld [vmem:[#allocation7 + $0x30] sm:$0xff]
    %v464 = vld [vmem:[#allocation7 + $0x38] sm:$0xff]
    %v465 = vld [vmem:[#allocation7 + $0x40] sm:$0xff]
    %v466 = vld [vmem:[#allocation7 + $0x48] sm:$0xff]
    %v467 = vld [vmem:[#allocation7 + $0x50] sm:$0xff]
    %v468 = vld [vmem:[#allocation7 + $0x58] sm:$0xff]
    %v469 = vld [vmem:[#allocation7 + $0x60] sm:$0xff]
    %v470 = vld [vmem:[#allocation7 + $0x68] sm:$0xff]
    %v471 = vld [vmem:[#allocation7 + $0x70] sm:$0xff]
    %v472 = vld [vmem:[#allocation7 + $0x78] sm:$0xff]
    %v473 = vld [vmem:[#allocation7 + $0x80] sm:$0xff]
    %v474 = vld [vmem:[#allocation7 + $0x88] sm:$0xff]
    %v475 = vld [vmem:[#allocation7 + $0x90] sm:$0xff]
    %v476 = vld [vmem:[#allocation7 + $0x98] sm:$0xff]
    %v477 = vld [vmem:[#allocation7 + $0xa0] sm:$0xff]
    %v478 = vld [vmem:[#allocation7 + $0xa8] sm:$0xff]
    %v479 = vld [vmem:[#allocation7 + $0xb0] sm:$0xff]
    %v480 = vld [vmem:[#allocation7 + $0xb8] sm:$0xff]
    %v481 = vld [vmem:[#allocation7 + $0xc0] sm:$0xff]
    %v482 = vld [vmem:[#allocation7 + $0xc8] sm:$0xff]
    %v483 = vld [vmem:[#allocation7 + $0xd0] sm:$0xff]
    %v484 = vld [vmem:[#allocation7 + $0xd8] sm:$0xff]
    %v485 = vld [vmem:[#allocation7 + $0xe0] sm:$0xff]
    %v486 = vld [vmem:[#allocation7 + $0xe8] sm:$0xff]
    %v487 = vld [vmem:[#allocation7 + $0xf0] sm:$0xff]
    %v488 = vld [vmem:[#allocation7 + $0xf8] sm:$0xff]
    %v489 = vld [vmem:[#allocation7 + $0x100] sm:$0xff]
    %v490 = vld [vmem:[#allocation7 + $0x108] sm:$0xff]
    %v491 = vld [vmem:[#allocation7 + $0x110] sm:$0xff]
    %v492 = vld [vmem:[#allocation7 + $0x118] sm:$0xff]
    %v493 = vld [vmem:[#allocation7 + $0x120] sm:$0xff]
    %v494 = vld [vmem:[#allocation7 + $0x128] sm:$0xff]
    %v495 = vld [vmem:[#allocation7 + $0x130] sm:$0xff]
    %v496 = vld [vmem:[#allocation7 + $0x138] sm:$0xff]
    %v497 = vld [vmem:[#allocation7 + $0x140] sm:$0xff]
    %v498 = vld [vmem:[#allocation7 + $0x148] sm:$0xff]
    %v499 = vld [vmem:[#allocation7 + $0x150] sm:$0xff]
    %v500 = vld [vmem:[#allocation7 + $0x158] sm:$0xff]
    %v501 = vld [vmem:[#allocation7 + $0x160] sm:$0xff]
    %v502 = vld [vmem:[#allocation7 + $0x168] sm:$0xff]
    %v503 = vld [vmem:[#allocation7 + $0x170] sm:$0xff]
    %v504 = vld [vmem:[#allocation7 + $0x178] sm:$0xff]
    %v505 = vld [vmem:[#allocation7 + $0x180] sm:$0xff]
    %v506 = vld [vmem:[#allocation7 + $0x188] sm:$0xff]
    %v507 = vld [vmem:[#allocation7 + $0x190] sm:$0xff]
    %v508 = vld [vmem:[#allocation7 + $0x198] sm:$0xff]
    %v509 = vld [vmem:[#allocation7 + $0x1a0] sm:$0xff]
    %v510 = vld [vmem:[#allocation7 + $0x1a8] sm:$0xff]
    %v511 = vld [vmem:[#allocation7 + $0x1b0] sm:$0xff]
    %v512 = vld [vmem:[#allocation7 + $0x1b8] sm:$0xff]
    %v513 = vld [vmem:[#allocation7 + $0x1c0] sm:$0xff]
    %v514 = vld [vmem:[#allocation7 + $0x1c8] sm:$0xff]
    %v515 = vld [vmem:[#allocation7 + $0x1d0] sm:$0xff]
    %v516 = vld [vmem:[#allocation7 + $0x1d8] sm:$0xff]
    %v517 = vld [vmem:[#allocation7 + $0x1e0] sm:$0xff]
    %v518 = vld [vmem:[#allocation7 + $0x1e8] sm:$0xff]
    %v519 = vld [vmem:[#allocation7 + $0x1f0] sm:$0xff]
    %v520 = vld [vmem:[#allocation7 + $0x1f8] sm:$0xff]
    %v521 = vld [vmem:[%s6] sm:$0x3]
    %v523 = vlaneseq
    %v524 = vshrl.u32 %v523, 7
    %v525 = vsub.s32 0, %v524
    %v526 = vrot.slane %v521, %v525
    %v527 = vlaneseq
    %v528 = vshrl.u32 %v527, 7
    %v529 = vsub.s32 1, %v528
    %v530 = vrot.slane %v521, %v529
    %533 = vmatprep.subr.mxu0 %v488
    %534 = vmatpush1.msra.mxu0 %v487
    %535 = vmatprep.subr.mxu0 %v486
    %536 = vmatpush1.msra.mxu0 %v485
    %537 = vmatprep.subr.mxu0 %v484
    %538 = vmatpush1.msra.mxu0 %v483
    %539 = vmatprep.subr.mxu0 %v482
    %540 = vmatpush1.msra.mxu0 %v481
    %541 = vmatprep.subr.mxu0 %v480
    %542 = vmatpush1.msra.mxu0 %v479
    %543 = vmatprep.subr.mxu0 %v478
    %544 = vmatpush1.msra.mxu0 %v477
    %545 = vmatprep.subr.mxu0 %v476
    %546 = vmatpush1.msra.mxu0 %v475
    %547 = vmatprep.subr.mxu0 %v474
    %548 = vmatpush1.msra.mxu0 %v473
    %549 = vmatprep.subr.mxu0 %v472
    %550 = vmatpush1.msra.mxu0 %v471
    %551 = vmatprep.subr.mxu0 %v470
    %552 = vmatpush1.msra.mxu0 %v469
    %553 = vmatprep.subr.mxu0 %v468
    %554 = vmatpush1.msra.mxu0 %v467
    %555 = vmatprep.subr.mxu0 %v466
    %556 = vmatpush1.msra.mxu0 %v465
    %557 = vmatprep.subr.mxu0 %v464
    %558 = vmatpush1.msra.mxu0 %v463
    %559 = vmatprep.subr.mxu0 %v462
    %560 = vmatpush1.msra.mxu0 %v461
    %561 = vmatprep.subr.mxu0 %v460
    %562 = vmatpush1.msra.mxu0 %v459
    %563 = vmatprep.subr.mxu0 %v458
    %564 = vmatpush1.msra.mxu0 %v457
    %565 = vmatprep.subr.mxu0 %v520
    %566 = vmatpush2.msra.mxu0 %v519
    %567 = vmatprep.subr.mxu0 %v518
    %568 = vmatpush2.msra.mxu0 %v517
    %569 = vmatprep.subr.mxu0 %v516
    %570 = vmatpush2.msra.mxu0 %v515
    %571 = vmatprep.subr.mxu0 %v514
    %572 = vmatpush2.msra.mxu0 %v513
    %573 = vmatprep.subr.mxu0 %v512
    %574 = vmatpush2.msra.mxu0 %v511
    %575 = vmatprep.subr.mxu0 %v510
    %576 = vmatpush2.msra.mxu0 %v509
    %577 = vmatprep.subr.mxu0 %v508
    %578 = vmatpush2.msra.mxu0 %v507
    %579 = vmatprep.subr.mxu0 %v506
    %580 = vmatpush2.msra.mxu0 %v505
    %581 = vmatprep.subr.mxu0 %v504
    %582 = vmatpush2.msra.mxu0 %v503
    %583 = vmatprep.subr.mxu0 %v502
    %584 = vmatpush2.msra.mxu0 %v501
    %585 = vmatprep.subr.mxu0 %v500
    %586 = vmatpush2.msra.mxu0 %v499
    %587 = vmatprep.subr.mxu0 %v498
    %588 = vmatpush2.msra.mxu0 %v497
    %589 = vmatprep.subr.mxu0 %v496
    %590 = vmatpush2.msra.mxu0 %v495
    %591 = vmatprep.subr.mxu0 %v494
    %592 = vmatpush2.msra.mxu0 %v493
    %593 = vmatprep.subr.mxu0 %v492
    %594 = vmatpush2.msra.mxu0 %v491
    %595 = vmatprep.subr.mxu0 %v490
    %596 = vmatpush2.msra.mxu0 %v489
    %597 = vmatprep.mubr.f32.mxu0 %v456
    %598 = vmatmul.mubr.f32.gmra.mxu0 %v455
    %v599 = vpop.f32.mrf.mxu0
    %v600 = vadd.f32 %v526, %v599
    %v601 = vpop.f32.mrf.mxu0
    %v602 = vadd.f32 %v530, %v601
    %603 = vdwg.mxu0
    %vm604 = vcmp.gt.f32.partialorder %v600, 0.0
    %vm605 = vcmp.gt.f32.partialorder %v602, 0.0
    %v606 = vmin.f32 %v600, 0.0
    %v607 = vmin.f32 %v602, 0.0
    %v608 = vmul.f32 %v606, 1.442695
    %v609 = vpow.pop %v608
    %v610 = vmul.f32 %v607, 1.442695
    %v611 = vpow.pop %v610
    %v612 = vsub.f32 %v609, 1.0
    %v613 = vsub.f32 %v611, 1.0
    %v614 = vsel %vm604, %v600, %v612
    %v615 = vsel %vm605, %v602, %v613
    %v616 = vld [vmem:[%s7] sm:$0xff]
    %v617 = vld [vmem:[%s7 + $0x8] sm:$0xff]
    %v618 = vld [vmem:[%s7 + $0x10] sm:$0xff]
    %v619 = vld [vmem:[%s7 + $0x18] sm:$0xff]
    %v620 = vld [vmem:[%s7 + $0x20] sm:$0xff]
    %v621 = vld [vmem:[%s7 + $0x28] sm:$0xff]
    %v622 = vld [vmem:[%s7 + $0x30] sm:$0xff]
    %v623 = vld [vmem:[%s7 + $0x38] sm:$0xff]
    %v624 = vld [vmem:[%s7 + $0x40] sm:$0xff]
    %v625 = vld [vmem:[%s7 + $0x48] sm:$0xff]
    %v626 = vld [vmem:[%s7 + $0x50] sm:$0xff]
    %v627 = vld [vmem:[%s7 + $0x58] sm:$0xff]
    %v628 = vld [vmem:[%s7 + $0x60] sm:$0xff]
    %v629 = vld [vmem:[%s7 + $0x68] sm:$0xff]
    %v630 = vld [vmem:[%s7 + $0x70] sm:$0xff]
    %v631 = vld [vmem:[%s7 + $0x78] sm:$0xff]
    %v632 = vld [vmem:[%s7 + $0x80] sm:$0xff]
    %v633 = vld [vmem:[%s7 + $0x88] sm:$0xff]
    %v634 = vld [vmem:[%s7 + $0x90] sm:$0xff]
    %v635 = vld [vmem:[%s7 + $0x98] sm:$0xff]
    %v636 = vld [vmem:[%s7 + $0xa0] sm:$0xff]
    %v637 = vld [vmem:[%s7 + $0xa8] sm:$0xff]
    %v638 = vld [vmem:[%s7 + $0xb0] sm:$0xff]
    %v639 = vld [vmem:[%s7 + $0xb8] sm:$0xff]
    %v640 = vld [vmem:[%s7 + $0xc0] sm:$0xff]
    %v641 = vld [vmem:[%s7 + $0xc8] sm:$0xff]
    %v642 = vld [vmem:[%s7 + $0xd0] sm:$0xff]
    %v643 = vld [vmem:[%s7 + $0xd8] sm:$0xff]
    %v644 = vld [vmem:[%s7 + $0xe0] sm:$0xff]
    %v645 = vld [vmem:[%s7 + $0xe8] sm:$0xff]
    %v646 = vld [vmem:[%s7 + $0xf0] sm:$0xff]
    %v647 = vld [vmem:[%s7 + $0xf8] sm:$0xff]
    %v648 = vld [vmem:[%s8] sm:$0x1]
    %v650 = vlaneseq
    %v651 = vshrl.u32 %v650, 7
    %v652 = vsub.s32 0, %v651
    %v653 = vrot.slane %v648, %v652
    %655 = vmatprep.subr.mxu0 0.0
    %656 = vmatpush1.msra.mxu0 %v631
    %657 = vmatprep.subr.mxu0 0.0
    %658 = vmatpush1.msra.mxu0 %v630
    %659 = vmatprep.subr.mxu0 0.0
    %660 = vmatpush1.msra.mxu0 %v629
    %661 = vmatprep.subr.mxu0 0.0
    %662 = vmatpush1.msra.mxu0 %v628
    %663 = vmatprep.subr.mxu0 0.0
    %664 = vmatpush1.msra.mxu0 %v627
    %665 = vmatprep.subr.mxu0 0.0
    %666 = vmatpush1.msra.mxu0 %v626
    %667 = vmatprep.subr.mxu0 0.0
    %668 = vmatpush1.msra.mxu0 %v625
    %669 = vmatprep.subr.mxu0 0.0
    %670 = vmatpush1.msra.mxu0 %v624
    %671 = vmatprep.subr.mxu0 0.0
    %672 = vmatpush1.msra.mxu0 %v623
    %673 = vmatprep.subr.mxu0 0.0
    %674 = vmatpush1.msra.mxu0 %v622
    %675 = vmatprep.subr.mxu0 0.0
    %676 = vmatpush1.msra.mxu0 %v621
    %677 = vmatprep.subr.mxu0 0.0
    %678 = vmatpush1.msra.mxu0 %v620
    %679 = vmatprep.subr.mxu0 0.0
    %680 = vmatpush1.msra.mxu0 %v619
    %681 = vmatprep.subr.mxu0 0.0
    %682 = vmatpush1.msra.mxu0 %v618
    %683 = vmatprep.subr.mxu0 0.0
    %684 = vmatpush1.msra.mxu0 %v617
    %685 = vmatprep.subr.mxu0 0.0
    %686 = vmatpush1.msra.mxu0 %v616
    %687 = vmatprep.subr.mxu0 0.0
    %688 = vmatpush2.msra.mxu0 %v647
    %689 = vmatprep.subr.mxu0 0.0
    %690 = vmatpush2.msra.mxu0 %v646
    %691 = vmatprep.subr.mxu0 0.0
    %692 = vmatpush2.msra.mxu0 %v645
    %693 = vmatprep.subr.mxu0 0.0
    %694 = vmatpush2.msra.mxu0 %v644
    %695 = vmatprep.subr.mxu0 0.0
    %696 = vmatpush2.msra.mxu0 %v643
    %697 = vmatprep.subr.mxu0 0.0
    %698 = vmatpush2.msra.mxu0 %v642
    %699 = vmatprep.subr.mxu0 0.0
    %700 = vmatpush2.msra.mxu0 %v641
    %701 = vmatprep.subr.mxu0 0.0
    %702 = vmatpush2.msra.mxu0 %v640
    %703 = vmatprep.subr.mxu0 0.0
    %704 = vmatpush2.msra.mxu0 %v639
    %705 = vmatprep.subr.mxu0 0.0
    %706 = vmatpush2.msra.mxu0 %v638
    %707 = vmatprep.subr.mxu0 0.0
    %708 = vmatpush2.msra.mxu0 %v637
    %709 = vmatprep.subr.mxu0 0.0
    %710 = vmatpush2.msra.mxu0 %v636
    %711 = vmatprep.subr.mxu0 0.0
    %712 = vmatpush2.msra.mxu0 %v635
    %713 = vmatprep.subr.mxu0 0.0
    %714 = vmatpush2.msra.mxu0 %v634
    %715 = vmatprep.subr.mxu0 0.0
    %716 = vmatpush2.msra.mxu0 %v633
    %717 = vmatprep.subr.mxu0 0.0
    %718 = vmatpush2.msra.mxu0 %v632
    %719 = vmatprep.mubr.f32.mxu0 %v615
    %720 = vmatmul.mubr.f32.gmra.mxu0 %v614
    %v721 = vpop.f32.mrf.mxu0
    %v722 = vadd.f32 %v653, %v721
    %v723 = vpop.f32.mrf.mxu0
    %724 = vdwg.mxu0
    %v725 = vld [vmem:[%s9] sm:$0xff]
    %v726 = vld [vmem:[%s9 + $0x8] sm:$0xff]
    %v727 = vld [vmem:[%s9 + $0x10] sm:$0xff]
    %v728 = vld [vmem:[%s9 + $0x18] sm:$0xff]
    %v729 = vld [vmem:[%s9 + $0x20] sm:$0xff]
    %v730 = vld [vmem:[%s9 + $0x28] sm:$0xff]
    %v731 = vld [vmem:[%s9 + $0x30] sm:$0xff]
    %v732 = vld [vmem:[%s9 + $0x38] sm:$0xff]
    %v733 = vld [vmem:[%s10] sm:$0x3]
    %v735 = vlaneseq
    %v736 = vshrl.u32 %v735, 7
    %v737 = vsub.s32 0, %v736
    %v738 = vrot.slane %v733, %v737
    %v739 = vlaneseq
    %v740 = vshrl.u32 %v739, 7
    %v741 = vsub.s32 1, %v740
    %v742 = vrot.slane %v733, %v741
    %vm745 = vcmask 261120
    %v747 = vsel %vm745, %v722, 0
    %749 = vmatprep.subr.mxu0 0.0
    %750 = vmatpush1.msra.mxu0 0.0
    %751 = vmatprep.subr.mxu0 0.0
    %752 = vmatpush1.msra.mxu0 0.0
    %753 = vmatprep.subr.mxu0 0.0
    %754 = vmatpush1.msra.mxu0 0.0
    %755 = vmatprep.subr.mxu0 0.0
    %756 = vmatpush1.msra.mxu0 0.0
    %757 = vmatprep.subr.mxu0 0.0
    %758 = vmatpush1.msra.mxu0 0.0
    %759 = vmatprep.subr.mxu0 0.0
    %760 = vmatpush1.msra.mxu0 0.0
    %761 = vmatprep.subr.mxu0 0.0
    %762 = vmatpush1.msra.mxu0 0.0
    %763 = vmatprep.subr.mxu0 0.0
    %764 = vmatpush1.msra.mxu0 0.0
    %765 = vmatprep.subr.mxu0 0.0
    %766 = vmatpush1.msra.mxu0 0.0
    %767 = vmatprep.subr.mxu0 0.0
    %768 = vmatpush1.msra.mxu0 0.0
    %769 = vmatprep.subr.mxu0 0.0
    %770 = vmatpush1.msra.mxu0 0.0
    %771 = vmatprep.subr.mxu0 0.0
    %772 = vmatpush1.msra.mxu0 0.0
    %773 = vmatprep.subr.mxu0 %v732
    %774 = vmatpush1.msra.mxu0 %v731
    %775 = vmatprep.subr.mxu0 %v730
    %776 = vmatpush1.msra.mxu0 %v729
    %777 = vmatprep.subr.mxu0 %v728
    %778 = vmatpush1.msra.mxu0 %v727
    %779 = vmatprep.subr.mxu0 %v726
    %780 = vmatpush1.msra.mxu0 %v725
    %781 = vmatprep.subr.mxu0 0.0
    %782 = vmatpush2.msra.mxu0 0.0
    %783 = vmatprep.subr.mxu0 0.0
    %784 = vmatpush2.msra.mxu0 0.0
    %785 = vmatprep.subr.mxu0 0.0
    %786 = vmatpush2.msra.mxu0 0.0
    %787 = vmatprep.subr.mxu0 0.0
    %788 = vmatpush2.msra.mxu0 0.0
    %789 = vmatprep.subr.mxu0 0.0
    %790 = vmatpush2.msra.mxu0 0.0
    %791 = vmatprep.subr.mxu0 0.0
    %792 = vmatpush2.msra.mxu0 0.0
    %793 = vmatprep.subr.mxu0 0.0
    %794 = vmatpush2.msra.mxu0 0.0
    %795 = vmatprep.subr.mxu0 0.0
    %796 = vmatpush2.msra.mxu0 0.0
    %797 = vmatprep.subr.mxu0 0.0
    %798 = vmatpush2.msra.mxu0 0.0
    %799 = vmatprep.subr.mxu0 0.0
    %800 = vmatpush2.msra.mxu0 0.0
    %801 = vmatprep.subr.mxu0 0.0
    %802 = vmatpush2.msra.mxu0 0.0
    %803 = vmatprep.subr.mxu0 0.0
    %804 = vmatpush2.msra.mxu0 0.0
    %805 = vmatprep.subr.mxu0 0.0
    %806 = vmatpush2.msra.mxu0 0.0
    %807 = vmatprep.subr.mxu0 0.0
    %808 = vmatpush2.msra.mxu0 0.0
    %809 = vmatprep.subr.mxu0 0.0
    %810 = vmatpush2.msra.mxu0 0.0
    %811 = vmatprep.subr.mxu0 0.0
    %812 = vmatpush2.msra.mxu0 0.0
    %813 = vmatprep.mubr.f32.mxu0 0.0
    %814 = vmatmul.mubr.f32.gmra.mxu0 %v747
    %v815 = vpop.f32.mrf.mxu0
    %v816 = vadd.f32 %v738, %v815
    %v817 = vpop.f32.mrf.mxu0
    %v818 = vadd.f32 %v742, %v817
    %819 = vdwg.mxu0
    %v820 = vld [vmem:[#allocation8] sm:$0xff]
    %v821 = vld [vmem:[#allocation8 + $0x8] sm:$0xff]
    %v822 = vld [vmem:[#allocation8 + $0x10] sm:$0xff]
    %v823 = vld [vmem:[#allocation8 + $0x18] sm:$0xff]
    %v824 = vld [vmem:[#allocation8 + $0x20] sm:$0xff]
    %v825 = vld [vmem:[#allocation8 + $0x28] sm:$0xff]
    %v826 = vld [vmem:[#allocation8 + $0x30] sm:$0xff]
    %v827 = vld [vmem:[#allocation8 + $0x38] sm:$0xff]
    %v828 = vld [vmem:[#allocation8 + $0x40] sm:$0xff]
    %v829 = vld [vmem:[#allocation8 + $0x48] sm:$0xff]
    %v830 = vld [vmem:[#allocation8 + $0x50] sm:$0xff]
    %v831 = vld [vmem:[#allocation8 + $0x58] sm:$0xff]
    %v832 = vld [vmem:[#allocation8 + $0x60] sm:$0xff]
    %v833 = vld [vmem:[#allocation8 + $0x68] sm:$0xff]
    %v834 = vld [vmem:[#allocation8 + $0x70] sm:$0xff]
    %v835 = vld [vmem:[#allocation8 + $0x78] sm:$0xff]
    %v836 = vld [vmem:[#allocation8 + $0x80] sm:$0xff]
    %v837 = vld [vmem:[#allocation8 + $0x88] sm:$0xff]
    %v838 = vld [vmem:[#allocation8 + $0x90] sm:$0xff]
    %v839 = vld [vmem:[#allocation8 + $0x98] sm:$0xff]
    %v840 = vld [vmem:[#allocation8 + $0xa0] sm:$0xff]
    %v841 = vld [vmem:[#allocation8 + $0xa8] sm:$0xff]
    %v842 = vld [vmem:[#allocation8 + $0xb0] sm:$0xff]
    %v843 = vld [vmem:[#allocation8 + $0xb8] sm:$0xff]
    %v844 = vld [vmem:[#allocation8 + $0xc0] sm:$0xff]
    %v845 = vld [vmem:[#allocation8 + $0xc8] sm:$0xff]
    %v846 = vld [vmem:[#allocation8 + $0xd0] sm:$0xff]
    %v847 = vld [vmem:[#allocation8 + $0xd8] sm:$0xff]
    %v848 = vld [vmem:[#allocation8 + $0xe0] sm:$0xff]
    %v849 = vld [vmem:[#allocation8 + $0xe8] sm:$0xff]
    %v850 = vld [vmem:[#allocation8 + $0xf0] sm:$0xff]
    %v851 = vld [vmem:[#allocation8 + $0xf8] sm:$0xff]
    %v852 = vld [vmem:[#allocation8 + $0x100] sm:$0xff]
    %v853 = vld [vmem:[#allocation8 + $0x108] sm:$0xff]
    %v854 = vld [vmem:[#allocation8 + $0x110] sm:$0xff]
    %v855 = vld [vmem:[#allocation8 + $0x118] sm:$0xff]
    %v856 = vld [vmem:[#allocation8 + $0x120] sm:$0xff]
    %v857 = vld [vmem:[#allocation8 + $0x128] sm:$0xff]
    %v858 = vld [vmem:[#allocation8 + $0x130] sm:$0xff]
    %v859 = vld [vmem:[#allocation8 + $0x138] sm:$0xff]
    %v860 = vld [vmem:[#allocation8 + $0x140] sm:$0xff]
    %v861 = vld [vmem:[#allocation8 + $0x148] sm:$0xff]
    %v862 = vld [vmem:[#allocation8 + $0x150] sm:$0xff]
    %v863 = vld [vmem:[#allocation8 + $0x158] sm:$0xff]
    %v864 = vld [vmem:[#allocation8 + $0x160] sm:$0xff]
    %v865 = vld [vmem:[#allocation8 + $0x168] sm:$0xff]
    %v866 = vld [vmem:[#allocation8 + $0x170] sm:$0xff]
    %v867 = vld [vmem:[#allocation8 + $0x178] sm:$0xff]
    %v868 = vld [vmem:[#allocation8 + $0x180] sm:$0xff]
    %v869 = vld [vmem:[#allocation8 + $0x188] sm:$0xff]
    %v870 = vld [vmem:[#allocation8 + $0x190] sm:$0xff]
    %v871 = vld [vmem:[#allocation8 + $0x198] sm:$0xff]
    %v872 = vld [vmem:[#allocation8 + $0x1a0] sm:$0xff]
    %v873 = vld [vmem:[#allocation8 + $0x1a8] sm:$0xff]
    %v874 = vld [vmem:[#allocation8 + $0x1b0] sm:$0xff]
    %v875 = vld [vmem:[#allocation8 + $0x1b8] sm:$0xff]
    %v876 = vld [vmem:[#allocation8 + $0x1c0] sm:$0xff]
    %v877 = vld [vmem:[#allocation8 + $0x1c8] sm:$0xff]
    %v878 = vld [vmem:[#allocation8 + $0x1d0] sm:$0xff]
    %v879 = vld [vmem:[#allocation8 + $0x1d8] sm:$0xff]
    %v880 = vld [vmem:[#allocation8 + $0x1e0] sm:$0xff]
    %v881 = vld [vmem:[#allocation8 + $0x1e8] sm:$0xff]
    %v882 = vld [vmem:[#allocation8 + $0x1f0] sm:$0xff]
    %v883 = vld [vmem:[#allocation8 + $0x1f8] sm:$0xff]
    %v884 = vld [vmem:[%s12] sm:$0x3]
    %v886 = vlaneseq
    %v887 = vshrl.u32 %v886, 7
    %v888 = vsub.s32 0, %v887
    %v889 = vrot.slane %v884, %v888
    %v890 = vlaneseq
    %v891 = vshrl.u32 %v890, 7
    %v892 = vsub.s32 1, %v891
    %v893 = vrot.slane %v884, %v892
    %896 = vmatprep.subr.mxu0 %v851
    %897 = vmatpush1.msra.mxu0 %v850
    %898 = vmatprep.subr.mxu0 %v849
    %899 = vmatpush1.msra.mxu0 %v848
    %900 = vmatprep.subr.mxu0 %v847
    %901 = vmatpush1.msra.mxu0 %v846
    %902 = vmatprep.subr.mxu0 %v845
    %903 = vmatpush1.msra.mxu0 %v844
    %904 = vmatprep.subr.mxu0 %v843
    %905 = vmatpush1.msra.mxu0 %v842
    %906 = vmatprep.subr.mxu0 %v841
    %907 = vmatpush1.msra.mxu0 %v840
    %908 = vmatprep.subr.mxu0 %v839
    %909 = vmatpush1.msra.mxu0 %v838
    %910 = vmatprep.subr.mxu0 %v837
    %911 = vmatpush1.msra.mxu0 %v836
    %912 = vmatprep.subr.mxu0 %v835
    %913 = vmatpush1.msra.mxu0 %v834
    %914 = vmatprep.subr.mxu0 %v833
    %915 = vmatpush1.msra.mxu0 %v832
    %916 = vmatprep.subr.mxu0 %v831
    %917 = vmatpush1.msra.mxu0 %v830
    %918 = vmatprep.subr.mxu0 %v829
    %919 = vmatpush1.msra.mxu0 %v828
    %920 = vmatprep.subr.mxu0 %v827
    %921 = vmatpush1.msra.mxu0 %v826
    %922 = vmatprep.subr.mxu0 %v825
    %923 = vmatpush1.msra.mxu0 %v824
    %924 = vmatprep.subr.mxu0 %v823
    %925 = vmatpush1.msra.mxu0 %v822
    %926 = vmatprep.subr.mxu0 %v821
    %927 = vmatpush1.msra.mxu0 %v820
    %928 = vmatprep.subr.mxu0 %v883
    %929 = vmatpush2.msra.mxu0 %v882
    %930 = vmatprep.subr.mxu0 %v881
    %931 = vmatpush2.msra.mxu0 %v880
    %932 = vmatprep.subr.mxu0 %v879
    %933 = vmatpush2.msra.mxu0 %v878
    %934 = vmatprep.subr.mxu0 %v877
    %935 = vmatpush2.msra.mxu0 %v876
    %936 = vmatprep.subr.mxu0 %v875
    %937 = vmatpush2.msra.mxu0 %v874
    %938 = vmatprep.subr.mxu0 %v873
    %939 = vmatpush2.msra.mxu0 %v872
    %940 = vmatprep.subr.mxu0 %v871
    %941 = vmatpush2.msra.mxu0 %v870
    %942 = vmatprep.subr.mxu0 %v869
    %943 = vmatpush2.msra.mxu0 %v868
    %944 = vmatprep.subr.mxu0 %v867
    %945 = vmatpush2.msra.mxu0 %v866
    %946 = vmatprep.subr.mxu0 %v865
    %947 = vmatpush2.msra.mxu0 %v864
    %948 = vmatprep.subr.mxu0 %v863
    %949 = vmatpush2.msra.mxu0 %v862
    %950 = vmatprep.subr.mxu0 %v861
    %951 = vmatpush2.msra.mxu0 %v860
    %952 = vmatprep.subr.mxu0 %v859
    %953 = vmatpush2.msra.mxu0 %v858
    %954 = vmatprep.subr.mxu0 %v857
    %955 = vmatpush2.msra.mxu0 %v856
    %956 = vmatprep.subr.mxu0 %v855
    %957 = vmatpush2.msra.mxu0 %v854
    %958 = vmatprep.subr.mxu0 %v853
    %959 = vmatpush2.msra.mxu0 %v852
    %960 = vmatprep.mubr.f32.mxu0 %v818
    %961 = vmatmul.mubr.f32.gmra.mxu0 %v816
    %v962 = vpop.f32.mrf.mxu0
    %v963 = vadd.f32 %v889, %v962
    %v964 = vpop.f32.mrf.mxu0
    %v965 = vadd.f32 %v893, %v964
    %966 = vdwg.mxu0
    %vm967 = vcmp.gt.f32.partialorder %v963, 0.0
    %vm968 = vcmp.gt.f32.partialorder %v965, 0.0
    %v969 = vmin.f32 %v963, 0.0
    %v970 = vmin.f32 %v965, 0.0
    %v971 = vmul.f32 %v969, 1.442695
    %v972 = vpow.pop %v971
    %v973 = vmul.f32 %v970, 1.442695
    %v974 = vpow.pop %v973
    %v975 = vsub.f32 %v972, 1.0
    %v976 = vsub.f32 %v974, 1.0
    %v977 = vsel %vm967, %v963, %v975
    %v978 = vsel %vm968, %v965, %v976
    %v979 = vld [vmem:[#allocation10] sm:$0xff]
    %v980 = vld [vmem:[#allocation10 + $0x8] sm:$0xff]
    %v981 = vld [vmem:[#allocation10 + $0x10] sm:$0xff]
    %v982 = vld [vmem:[#allocation10 + $0x18] sm:$0xff]
    %v983 = vld [vmem:[#allocation10 + $0x20] sm:$0xff]
    %v984 = vld [vmem:[#allocation10 + $0x28] sm:$0xff]
    %v985 = vld [vmem:[#allocation10 + $0x30] sm:$0xff]
    %v986 = vld [vmem:[#allocation10 + $0x38] sm:$0xff]
    %v987 = vld [vmem:[#allocation10 + $0x40] sm:$0xff]
    %v988 = vld [vmem:[#allocation10 + $0x48] sm:$0xff]
    %v989 = vld [vmem:[#allocation10 + $0x50] sm:$0xff]
    %v990 = vld [vmem:[#allocation10 + $0x58] sm:$0xff]
    %v991 = vld [vmem:[#allocation10 + $0x60] sm:$0xff]
    %v992 = vld [vmem:[#allocation10 + $0x68] sm:$0xff]
    %v993 = vld [vmem:[#allocation10 + $0x70] sm:$0xff]
    %v994 = vld [vmem:[#allocation10 + $0x78] sm:$0xff]
    %v995 = vld [vmem:[#allocation10 + $0x80] sm:$0xff]
    %v996 = vld [vmem:[#allocation10 + $0x88] sm:$0xff]
    %v997 = vld [vmem:[#allocation10 + $0x90] sm:$0xff]
    %v998 = vld [vmem:[#allocation10 + $0x98] sm:$0xff]
    %v999 = vld [vmem:[#allocation10 + $0xa0] sm:$0xff]
    %v1000 = vld [vmem:[#allocation10 + $0xa8] sm:$0xff]
    %v1001 = vld [vmem:[#allocation10 + $0xb0] sm:$0xff]
    %v1002 = vld [vmem:[#allocation10 + $0xb8] sm:$0xff]
    %v1003 = vld [vmem:[#allocation10 + $0xc0] sm:$0xff]
    %v1004 = vld [vmem:[#allocation10 + $0xc8] sm:$0xff]
    %v1005 = vld [vmem:[#allocation10 + $0xd0] sm:$0xff]
    %v1006 = vld [vmem:[#allocation10 + $0xd8] sm:$0xff]
    %v1007 = vld [vmem:[#allocation10 + $0xe0] sm:$0xff]
    %v1008 = vld [vmem:[#allocation10 + $0xe8] sm:$0xff]
    %v1009 = vld [vmem:[#allocation10 + $0xf0] sm:$0xff]
    %v1010 = vld [vmem:[#allocation10 + $0xf8] sm:$0xff]
    %v1011 = vld [vmem:[#allocation10 + $0x100] sm:$0xff]
    %v1012 = vld [vmem:[#allocation10 + $0x108] sm:$0xff]
    %v1013 = vld [vmem:[#allocation10 + $0x110] sm:$0xff]
    %v1014 = vld [vmem:[#allocation10 + $0x118] sm:$0xff]
    %v1015 = vld [vmem:[#allocation10 + $0x120] sm:$0xff]
    %v1016 = vld [vmem:[#allocation10 + $0x128] sm:$0xff]
    %v1017 = vld [vmem:[#allocation10 + $0x130] sm:$0xff]
    %v1018 = vld [vmem:[#allocation10 + $0x138] sm:$0xff]
    %v1019 = vld [vmem:[#allocation10 + $0x140] sm:$0xff]
    %v1020 = vld [vmem:[#allocation10 + $0x148] sm:$0xff]
    %v1021 = vld [vmem:[#allocation10 + $0x150] sm:$0xff]
    %v1022 = vld [vmem:[#allocation10 + $0x158] sm:$0xff]
    %v1023 = vld [vmem:[#allocation10 + $0x160] sm:$0xff]
    %v1024 = vld [vmem:[#allocation10 + $0x168] sm:$0xff]
    %v1025 = vld [vmem:[#allocation10 + $0x170] sm:$0xff]
    %v1026 = vld [vmem:[#allocation10 + $0x178] sm:$0xff]
    %v1027 = vld [vmem:[#allocation10 + $0x180] sm:$0xff]
    %v1028 = vld [vmem:[#allocation10 + $0x188] sm:$0xff]
    %v1029 = vld [vmem:[#allocation10 + $0x190] sm:$0xff]
    %v1030 = vld [vmem:[#allocation10 + $0x198] sm:$0xff]
    %v1031 = vld [vmem:[#allocation10 + $0x1a0] sm:$0xff]
    %v1032 = vld [vmem:[#allocation10 + $0x1a8] sm:$0xff]
    %v1033 = vld [vmem:[#allocation10 + $0x1b0] sm:$0xff]
    %v1034 = vld [vmem:[#allocation10 + $0x1b8] sm:$0xff]
    %v1035 = vld [vmem:[#allocation10 + $0x1c0] sm:$0xff]
    %v1036 = vld [vmem:[#allocation10 + $0x1c8] sm:$0xff]
    %v1037 = vld [vmem:[#allocation10 + $0x1d0] sm:$0xff]
    %v1038 = vld [vmem:[#allocation10 + $0x1d8] sm:$0xff]
    %v1039 = vld [vmem:[#allocation10 + $0x1e0] sm:$0xff]
    %v1040 = vld [vmem:[#allocation10 + $0x1e8] sm:$0xff]
    %v1041 = vld [vmem:[#allocation10 + $0x1f0] sm:$0xff]
    %v1042 = vld [vmem:[#allocation10 + $0x1f8] sm:$0xff]
    %v1043 = vld [vmem:[%s14] sm:$0x3]
    %v1045 = vlaneseq
    %v1046 = vshrl.u32 %v1045, 7
    %v1047 = vsub.s32 0, %v1046
    %v1048 = vrot.slane %v1043, %v1047
    %v1049 = vlaneseq
    %v1050 = vshrl.u32 %v1049, 7
    %v1051 = vsub.s32 1, %v1050
    %v1052 = vrot.slane %v1043, %v1051
    %1055 = vmatprep.subr.mxu0 %v1010
    %1056 = vmatpush1.msra.mxu0 %v1009
    %1057 = vmatprep.subr.mxu0 %v1008
    %1058 = vmatpush1.msra.mxu0 %v1007
    %1059 = vmatprep.subr.mxu0 %v1006
    %1060 = vmatpush1.msra.mxu0 %v1005
    %1061 = vmatprep.subr.mxu0 %v1004
    %1062 = vmatpush1.msra.mxu0 %v1003
    %1063 = vmatprep.subr.mxu0 %v1002
    %1064 = vmatpush1.msra.mxu0 %v1001
    %1065 = vmatprep.subr.mxu0 %v1000
    %1066 = vmatpush1.msra.mxu0 %v999
    %1067 = vmatprep.subr.mxu0 %v998
    %1068 = vmatpush1.msra.mxu0 %v997
    %1069 = vmatprep.subr.mxu0 %v996
    %1070 = vmatpush1.msra.mxu0 %v995
    %1071 = vmatprep.subr.mxu0 %v994
    %1072 = vmatpush1.msra.mxu0 %v993
    %1073 = vmatprep.subr.mxu0 %v992
    %1074 = vmatpush1.msra.mxu0 %v991
    %1075 = vmatprep.subr.mxu0 %v990
    %1076 = vmatpush1.msra.mxu0 %v989
    %1077 = vmatprep.subr.mxu0 %v988
    %1078 = vmatpush1.msra.mxu0 %v987
    %1079 = vmatprep.subr.mxu0 %v986
    %1080 = vmatpush1.msra.mxu0 %v985
    %1081 = vmatprep.subr.mxu0 %v984
    %1082 = vmatpush1.msra.mxu0 %v983
    %1083 = vmatprep.subr.mxu0 %v982
    %1084 = vmatpush1.msra.mxu0 %v981
    %1085 = vmatprep.subr.mxu0 %v980
    %1086 = vmatpush1.msra.mxu0 %v979
    %1087 = vmatprep.subr.mxu0 %v1042
    %1088 = vmatpush2.msra.mxu0 %v1041
    %1089 = vmatprep.subr.mxu0 %v1040
    %1090 = vmatpush2.msra.mxu0 %v1039
    %1091 = vmatprep.subr.mxu0 %v1038
    %1092 = vmatpush2.msra.mxu0 %v1037
    %1093 = vmatprep.subr.mxu0 %v1036
    %1094 = vmatpush2.msra.mxu0 %v1035
    %1095 = vmatprep.subr.mxu0 %v1034
    %1096 = vmatpush2.msra.mxu0 %v1033
    %1097 = vmatprep.subr.mxu0 %v1032
    %1098 = vmatpush2.msra.mxu0 %v1031
    %1099 = vmatprep.subr.mxu0 %v1030
    %1100 = vmatpush2.msra.mxu0 %v1029
    %1101 = vmatprep.subr.mxu0 %v1028
    %1102 = vmatpush2.msra.mxu0 %v1027
    %1103 = vmatprep.subr.mxu0 %v1026
    %1104 = vmatpush2.msra.mxu0 %v1025
    %1105 = vmatprep.subr.mxu0 %v1024
    %1106 = vmatpush2.msra.mxu0 %v1023
    %1107 = vmatprep.subr.mxu0 %v1022
    %1108 = vmatpush2.msra.mxu0 %v1021
    %1109 = vmatprep.subr.mxu0 %v1020
    %1110 = vmatpush2.msra.mxu0 %v1019
    %1111 = vmatprep.subr.mxu0 %v1018
    %1112 = vmatpush2.msra.mxu0 %v1017
    %1113 = vmatprep.subr.mxu0 %v1016
    %1114 = vmatpush2.msra.mxu0 %v1015
    %1115 = vmatprep.subr.mxu0 %v1014
    %1116 = vmatpush2.msra.mxu0 %v1013
    %1117 = vmatprep.subr.mxu0 %v1012
    %1118 = vmatpush2.msra.mxu0 %v1011
    %1119 = vmatprep.mubr.f32.mxu0 %v978
    %1120 = vmatmul.mubr.f32.gmra.mxu0 %v977
    %v1121 = vpop.f32.mrf.mxu0
    %v1122 = vadd.f32 %v1048, %v1121
    %v1123 = vpop.f32.mrf.mxu0
    %v1124 = vadd.f32 %v1052, %v1123
    %1125 = vdwg.mxu0
    %vm1126 = vcmp.gt.f32.partialorder %v1122, 0.0
    %vm1127 = vcmp.gt.f32.partialorder %v1124, 0.0
    %v1128 = vmin.f32 %v1122, 0.0
    %v1129 = vmin.f32 %v1124, 0.0
    %v1130 = vmul.f32 %v1128, 1.442695
    %v1131 = vpow.pop %v1130
    %v1132 = vmul.f32 %v1129, 1.442695
    %v1133 = vpow.pop %v1132
    %v1134 = vsub.f32 %v1131, 1.0
    %v1135 = vsub.f32 %v1133, 1.0
    %v1136 = vsel %vm1126, %v1122, %v1134
    %v1137 = vsel %vm1127, %v1124, %v1135
    %v1138 = vld [vmem:[#allocation11] sm:$0xff]
    %v1139 = vld [vmem:[#allocation11 + $0x8] sm:$0xff]
    %v1140 = vld [vmem:[#allocation11 + $0x10] sm:$0xff]
    %v1141 = vld [vmem:[#allocation11 + $0x18] sm:$0xff]
    %v1142 = vld [vmem:[#allocation11 + $0x20] sm:$0xff]
    %v1143 = vld [vmem:[#allocation11 + $0x28] sm:$0xff]
    %v1144 = vld [vmem:[#allocation11 + $0x30] sm:$0xff]
    %v1145 = vld [vmem:[#allocation11 + $0x38] sm:$0xff]
    %v1146 = vld [vmem:[#allocation11 + $0x40] sm:$0xff]
    %v1147 = vld [vmem:[#allocation11 + $0x48] sm:$0xff]
    %v1148 = vld [vmem:[#allocation11 + $0x50] sm:$0xff]
    %v1149 = vld [vmem:[#allocation11 + $0x58] sm:$0xff]
    %v1150 = vld [vmem:[#allocation11 + $0x60] sm:$0xff]
    %v1151 = vld [vmem:[#allocation11 + $0x68] sm:$0xff]
    %v1152 = vld [vmem:[#allocation11 + $0x70] sm:$0xff]
    %v1153 = vld [vmem:[#allocation11 + $0x78] sm:$0xff]
    %v1154 = vld [vmem:[#allocation11 + $0x80] sm:$0xff]
    %v1155 = vld [vmem:[#allocation11 + $0x88] sm:$0xff]
    %v1156 = vld [vmem:[#allocation11 + $0x90] sm:$0xff]
    %v1157 = vld [vmem:[#allocation11 + $0x98] sm:$0xff]
    %v1158 = vld [vmem:[#allocation11 + $0xa0] sm:$0xff]
    %v1159 = vld [vmem:[#allocation11 + $0xa8] sm:$0xff]
    %v1160 = vld [vmem:[#allocation11 + $0xb0] sm:$0xff]
    %v1161 = vld [vmem:[#allocation11 + $0xb8] sm:$0xff]
    %v1162 = vld [vmem:[#allocation11 + $0xc0] sm:$0xff]
    %v1163 = vld [vmem:[#allocation11 + $0xc8] sm:$0xff]
    %v1164 = vld [vmem:[#allocation11 + $0xd0] sm:$0xff]
    %v1165 = vld [vmem:[#allocation11 + $0xd8] sm:$0xff]
    %v1166 = vld [vmem:[#allocation11 + $0xe0] sm:$0xff]
    %v1167 = vld [vmem:[#allocation11 + $0xe8] sm:$0xff]
    %v1168 = vld [vmem:[#allocation11 + $0xf0] sm:$0xff]
    %v1169 = vld [vmem:[#allocation11 + $0xf8] sm:$0xff]
    %v1170 = vld [vmem:[#allocation11 + $0x100] sm:$0xff]
    %v1171 = vld [vmem:[#allocation11 + $0x108] sm:$0xff]
    %v1172 = vld [vmem:[#allocation11 + $0x110] sm:$0xff]
    %v1173 = vld [vmem:[#allocation11 + $0x118] sm:$0xff]
    %v1174 = vld [vmem:[#allocation11 + $0x120] sm:$0xff]
    %v1175 = vld [vmem:[#allocation11 + $0x128] sm:$0xff]
    %v1176 = vld [vmem:[#allocation11 + $0x130] sm:$0xff]
    %v1177 = vld [vmem:[#allocation11 + $0x138] sm:$0xff]
    %v1178 = vld [vmem:[#allocation11 + $0x140] sm:$0xff]
    %v1179 = vld [vmem:[#allocation11 + $0x148] sm:$0xff]
    %v1180 = vld [vmem:[#allocation11 + $0x150] sm:$0xff]
    %v1181 = vld [vmem:[#allocation11 + $0x158] sm:$0xff]
    %v1182 = vld [vmem:[#allocation11 + $0x160] sm:$0xff]
    %v1183 = vld [vmem:[#allocation11 + $0x168] sm:$0xff]
    %v1184 = vld [vmem:[#allocation11 + $0x170] sm:$0xff]
    %v1185 = vld [vmem:[#allocation11 + $0x178] sm:$0xff]
    %v1186 = vld [vmem:[#allocation11 + $0x180] sm:$0xff]
    %v1187 = vld [vmem:[#allocation11 + $0x188] sm:$0xff]
    %v1188 = vld [vmem:[#allocation11 + $0x190] sm:$0xff]
    %v1189 = vld [vmem:[#allocation11 + $0x198] sm:$0xff]
    %v1190 = vld [vmem:[#allocation11 + $0x1a0] sm:$0xff]
    %v1191 = vld [vmem:[#allocation11 + $0x1a8] sm:$0xff]
    %v1192 = vld [vmem:[#allocation11 + $0x1b0] sm:$0xff]
    %v1193 = vld [vmem:[#allocation11 + $0x1b8] sm:$0xff]
    %v1194 = vld [vmem:[#allocation11 + $0x1c0] sm:$0xff]
    %v1195 = vld [vmem:[#allocation11 + $0x1c8] sm:$0xff]
    %v1196 = vld [vmem:[#allocation11 + $0x1d0] sm:$0xff]
    %v1197 = vld [vmem:[#allocation11 + $0x1d8] sm:$0xff]
    %v1198 = vld [vmem:[#allocation11 + $0x1e0] sm:$0xff]
    %v1199 = vld [vmem:[#allocation11 + $0x1e8] sm:$0xff]
    %v1200 = vld [vmem:[#allocation11 + $0x1f0] sm:$0xff]
    %v1201 = vld [vmem:[#allocation11 + $0x1f8] sm:$0xff]
    %v1202 = vld [vmem:[%s16] sm:$0x3]
    %v1204 = vlaneseq
    %v1205 = vshrl.u32 %v1204, 7
    %v1206 = vsub.s32 0, %v1205
    %v1207 = vrot.slane %v1202, %v1206
    %v1208 = vlaneseq
    %v1209 = vshrl.u32 %v1208, 7
    %v1210 = vsub.s32 1, %v1209
    %v1211 = vrot.slane %v1202, %v1210
    %1214 = vmatprep.subr.mxu0 %v1169
    %1215 = vmatpush1.msra.mxu0 %v1168
    %1216 = vmatprep.subr.mxu0 %v1167
    %1217 = vmatpush1.msra.mxu0 %v1166
    %1218 = vmatprep.subr.mxu0 %v1165
    %1219 = vmatpush1.msra.mxu0 %v1164
    %1220 = vmatprep.subr.mxu0 %v1163
    %1221 = vmatpush1.msra.mxu0 %v1162
    %1222 = vmatprep.subr.mxu0 %v1161
    %1223 = vmatpush1.msra.mxu0 %v1160
    %1224 = vmatprep.subr.mxu0 %v1159
    %1225 = vmatpush1.msra.mxu0 %v1158
    %1226 = vmatprep.subr.mxu0 %v1157
    %1227 = vmatpush1.msra.mxu0 %v1156
    %1228 = vmatprep.subr.mxu0 %v1155
    %1229 = vmatpush1.msra.mxu0 %v1154
    %1230 = vmatprep.subr.mxu0 %v1153
    %1231 = vmatpush1.msra.mxu0 %v1152
    %1232 = vmatprep.subr.mxu0 %v1151
    %1233 = vmatpush1.msra.mxu0 %v1150
    %1234 = vmatprep.subr.mxu0 %v1149
    %1235 = vmatpush1.msra.mxu0 %v1148
    %1236 = vmatprep.subr.mxu0 %v1147
    %1237 = vmatpush1.msra.mxu0 %v1146
    %1238 = vmatprep.subr.mxu0 %v1145
    %1239 = vmatpush1.msra.mxu0 %v1144
    %1240 = vmatprep.subr.mxu0 %v1143
    %1241 = vmatpush1.msra.mxu0 %v1142
    %1242 = vmatprep.subr.mxu0 %v1141
    %1243 = vmatpush1.msra.mxu0 %v1140
    %1244 = vmatprep.subr.mxu0 %v1139
    %1245 = vmatpush1.msra.mxu0 %v1138
    %1246 = vmatprep.subr.mxu0 %v1201
    %1247 = vmatpush2.msra.mxu0 %v1200
    %1248 = vmatprep.subr.mxu0 %v1199
    %1249 = vmatpush2.msra.mxu0 %v1198
    %1250 = vmatprep.subr.mxu0 %v1197
    %1251 = vmatpush2.msra.mxu0 %v1196
    %1252 = vmatprep.subr.mxu0 %v1195
    %1253 = vmatpush2.msra.mxu0 %v1194
    %1254 = vmatprep.subr.mxu0 %v1193
    %1255 = vmatpush2.msra.mxu0 %v1192
    %1256 = vmatprep.subr.mxu0 %v1191
    %1257 = vmatpush2.msra.mxu0 %v1190
    %1258 = vmatprep.subr.mxu0 %v1189
    %1259 = vmatpush2.msra.mxu0 %v1188
    %1260 = vmatprep.subr.mxu0 %v1187
    %1261 = vmatpush2.msra.mxu0 %v1186
    %1262 = vmatprep.subr.mxu0 %v1185
    %1263 = vmatpush2.msra.mxu0 %v1184
    %1264 = vmatprep.subr.mxu0 %v1183
    %1265 = vmatpush2.msra.mxu0 %v1182
    %1266 = vmatprep.subr.mxu0 %v1181
    %1267 = vmatpush2.msra.mxu0 %v1180
    %1268 = vmatprep.subr.mxu0 %v1179
    %1269 = vmatpush2.msra.mxu0 %v1178
    %1270 = vmatprep.subr.mxu0 %v1177
    %1271 = vmatpush2.msra.mxu0 %v1176
    %1272 = vmatprep.subr.mxu0 %v1175
    %1273 = vmatpush2.msra.mxu0 %v1174
    %1274 = vmatprep.subr.mxu0 %v1173
    %1275 = vmatpush2.msra.mxu0 %v1172
    %1276 = vmatprep.subr.mxu0 %v1171
    %1277 = vmatpush2.msra.mxu0 %v1170
    %1278 = vmatprep.mubr.f32.mxu0 %v1137
    %1279 = vmatmul.mubr.f32.gmra.mxu0 %v1136
    %v1280 = vpop.f32.mrf.mxu0
    %v1281 = vadd.f32 %v1207, %v1280
    %v1282 = vpop.f32.mrf.mxu0
    %v1283 = vadd.f32 %v1211, %v1282
    %1284 = vdwg.mxu0
    %v1287 = vcombine.low %v1281, %v1283
    %v1289 = vunpack.c.l.s4 1983009808
    %v1290 = vunpack.c.0.s8 %v1289
    %v1291 = vlaneseq
    %v1292 = vshrl.u32 %v1291, 7
    %v1293 = vsub.s32 %v1290, %v1292
    %v1294 = vrot.slane %v1287, %v1293
    %1296 = vst [vmem:[#allocation13] sm:$0xf] %v1294
    // Predicated region
    $region94: #{tpu_custom_call.1} parent=1 // pred_check
      _
    $region95: #{tpu_custom_call.1} parent=1 // pred_check_branch
      %1298 = sbr.rel (0) target = $region97
    $region96: #{tpu_custom_call.1} parent=1 // pred_region
      %s1300 = ssub.s32 64, 64
      %1301 = vsyncadd [#allocation4], %s1300
      %s1303 = sshll.u32 [#allocation13], 4
      %s1304 = int_to_ptr.vmem [resolvable:$true] %s1303
      %1306 = dma.vmem_to_hbm [thread:$0]  %s1304, 64, %s17, [#allocation4]
    $region97: #{tpu_custom_call.1} parent=1 // pred_fallthru
      _
    // Predicated region
    $region98: #{tpu_custom_call.1} parent=1 // pred_check
      _
    $region99: #{tpu_custom_call.1} parent=1 // pred_check_branch
      %1308 = sbr.rel (0) target = $region101
    $region100: #{tpu_custom_call.1} parent=1 // pred_region
      %1309 = dma.done [#allocation4], 64
    $region101: #{tpu_custom_call.1} parent=1 // pred_fallthru
      _
    %1310 = vsyncpa [#allocation3], 1
    %1311 = vsyncpa [#allocation6], 1
    %1312 = vsyncpa [#allocation9], 1
    %1313 = vsyncpa [#allocation12], 1
    %1314 = vsyncpa [#allocation4], 1

</llo_original>
